<compile_context>
chip_gen: v6e
topology: v6e:2x2x1
jax: 0.10.0
libtpu: 0.0.40
codegen_flags: <defaults>
</compile_context>

<pallas_src>
import jax
import jax.numpy as jnp
from jax.experimental import pallas as pl
from jax.experimental.pallas import tpu as pltpu

DIMS = [403, 350, 300, 250, 200, 150, 100, 75, 50, 25, 1]
IN_DIM = DIMS[0]
N_LAYERS = 10          # Linear layers
N_BN = 9               # BatchNorm1d after the first 9 Linears (last Linear -> Sigmoid)
BN_EPS = 1e-5


def _pad128(d):
    return max(128, -(-d // 128) * 128)


PK = [_pad128(DIMS[i]) for i in range(N_LAYERS)]        # padded in-dims  per layer
PM = [_pad128(DIMS[i + 1]) for i in range(N_LAYERS)]    # padded out-dims per layer
# Invariant: PM[i-1] == PK[i] for all i, so activations chain without re-padding.

# Group consecutive layers sharing the same padded in-dim into one weight slab
# (concatenated along the output/lane axis): [512x384], [384x640], [256x640], [128x512].
W_GROUPS = []
for _i in range(N_LAYERS):
    if _i == 0 or PK[_i] != PK[_i - 1]:
        W_GROUPS.append([_i])
    else:
        W_GROUPS[-1].append(_i)
N_SLABS = len(W_GROUPS)
W_SLOT = {}
for _s, _grp in enumerate(W_GROUPS):
    _off = 0
    for _i in _grp:
        W_SLOT[_i] = (_s, _off)
        _off += PM[_i]

B_ROWS = 16                          # >= N_LAYERS, sublane-aligned
B_COLS = max(PM)                     # 384
PAD_START = (IN_DIM // 128) * 128    # 384: first 128-aligned lane of the input zero-pad


def mlp_kernel(x_ref, *refs):
    """Whole MLP forward for one batch tile.

    x_ref            : VMEM f32[tile, 403]           raw (unpadded) input tile
    refs[0:N_SLABS]  : VMEM bf16 weight slabs        folded W^T, grouped by in-dim
    refs[N_SLABS]    : VMEM f32[16, 384]              bias slab (row i = bias of layer i)
    refs[N_SLABS+1]  : VMEM bf16[tile, 128]           output tile (real value in lane 0)
    refs[N_SLABS+2]  : VMEM bf16[tile, 512] scratch   lane-padded bf16 copy of the input
    """
    w_refs = refs[:N_SLABS]
    b_ref = refs[N_SLABS]
    o_ref = refs[N_SLABS + 1]
    xpad_ref = refs[N_SLABS + 2]
    tile = xpad_ref.shape[0]

    # Lane-pad + downcast the input inside VMEM (no padded copy ever touches HBM).
    # Zero the tail every step: with megacore "parallel" splitting, core 1 never runs grid
    # step 0, so a pl.when(step == 0) init would leave its scratch tail uninitialized.
    xpad_ref[:, PAD_START:] = jnp.zeros((tile, PK[0] - PAD_START), jnp.bfloat16)
    xpad_ref[:, :IN_DIM] = x_ref[...].astype(jnp.bfloat16)
    h = xpad_ref[...]                                        # bf16 (tile, 512)

    for i in range(N_LAYERS):                                # static unroll: 10 MXU matmuls
        s, off = W_SLOT[i]
        w = w_refs[s][:, off:off + PM[i]]                    # static, 128-aligned lane slice
        b = b_ref[i:i + 1, :PM[i]]                           # (1, PM[i]) f32, broadcasts
        acc = jnp.dot(h, w, preferred_element_type=jnp.float32) + b
        if i < N_BN:
            # BN already folded into W/b on the host; dropout is identity in eval mode.
            if i < 6:
                h = jnp.maximum(acc, 0.0).astype(jnp.bfloat16)    # ReLU, bf16 inter-layer
            else:
                h = jnp.clip(acc, 0.0, 6.0).astype(jnp.bfloat16)  # ReLU6
        else:
            h = jax.nn.sigmoid(acc)                               # final Sigmoid (f32)
    o_ref[...] = h.astype(jnp.bfloat16)


def init_params(key):
    """Deterministic synthetic parameters matching the PyTorch module's shapes."""
    params = []
    for i in range(N_LAYERS):
        fan_in, fan_out = DIMS[i], DIMS[i + 1]
        key, kw, kb = jax.random.split(key, 3)
        bound = 1.0 / jnp.sqrt(jnp.float32(fan_in))
        W = jax.random.uniform(kw, (fan_out, fan_in), jnp.float32, -bound, bound)
        b = jax.random.uniform(kb, (fan_out,), jnp.float32, -bound, bound)
        params.append((W, b))
    bns = []
    for _ in range(N_BN):
        key, k1, k2, k3, k4 = jax.random.split(key, 5)
        gamma = 1.0 + 0.1 * jax.random.normal(k1, (), jnp.float32)
        beta = 0.1 * jax.random.normal(k2, (), jnp.float32)
        rmean = 0.1 * jax.random.normal(k3, (), jnp.float32)
        rvar = 1.0 + 0.1 * jax.random.uniform(k4, (), jnp.float32)
        bns.append((gamma, beta, rmean, rvar))
    return params, bns


def pack_params(params, bns):
    """Fold eval-mode BN into each Linear, pad to 128-multiples, cast weights to bf16,
    and pack into per-in-dim weight slabs plus one bias slab."""
    wp = []
    b_slab = jnp.zeros((B_ROWS, B_COLS), jnp.float32)
    for i, (W, b) in enumerate(params):
        if i < N_BN:
            g, bt, m, v = bns[i]
            scale = g / jnp.sqrt(v + BN_EPS)            # scalar (num_features=1)
            shift = bt - m * scale
            Wf, bf = W * scale, b * scale + shift
        else:
            Wf, bf = W, b
        # torch Linear: y = x @ W.T + b ; W is (out, in) -> store W.T, zero-padded.
        Wp = jnp.zeros((PK[i], PM[i]), jnp.float32).at[:W.shape[1], :W.shape[0]].set(Wf.T)
        wp.append(Wp.astype(jnp.bfloat16))              # weight DMA in bf16
        b_slab = b_slab.at[i, :b.shape[0]].set(bf)      # biases stay f32 (tiny)
    w_slabs = [jnp.concatenate([wp[i] for i in grp], axis=1) for grp in W_GROUPS]
    return w_slabs, b_slab


def cnnetwork_long50_forward(x, w_slabs, b_slab, *, tile_n=1024):
    """x: (N, 1, 403) float32 (or bf16)  ->  (N, 1, 1) float32."""
    # TODO(synk): for tiny production batches (grid == 1) the call is weight-DMA
    # latency-bound (~1.3 MiB/call); keep weights VMEM-resident across calls
    # (cross-call future / input_output_aliases) or batch requests upstream.
    n = x.shape[0]
    x2 = x.reshape(n, IN_DIM)                     # drop channel dim (no data movement)

    n8 = max(8, -(-n // 8) * 8)                   # sublane-align the batch
    tile = max(8, (min(tile_n, n8) // 8) * 8)
    if n8 // tile < 2 and n8 >= 16:
        # v7x megacore: give the "parallel" batch axis >= 2 steps so both TCs get work.
        tile = max(8, ((n8 // 2) // 8) * 8)
    n_pad = -(-n8 // tile) * tile
    if n_pad != n:
        x2 = jnp.pad(x2, ((0, n_pad - n), (0, 0)))  # rows only; lane pad happens in VMEM

    inputs = [x2]
    # Input block keeps the raw 403-lane width (== full array dim, so legal): the only
    # activation HBM traffic is the original input, read once per tile.
    in_specs = [pl.BlockSpec((tile, IN_DIM), lambda g: (g, 0))]
    for s in range(N_SLABS):
        inputs.append(w_slabs[s])
        # Constant block index -> weight slabs stay VMEM-resident across grid steps.
        in_specs.append(pl.BlockSpec(w_slabs[s].shape, lambda g: (0, 0)))
    inputs.append(b_slab)
    in_specs.append(pl.BlockSpec(b_slab.shape, lambda g: (0, 0)))

    out_pad = pl.pallas_call(
        mlp_kernel,
        out_shape=jax.ShapeDtypeStruct((n_pad, PM[-1]), jnp.bfloat16),
        grid=(n_pad // tile,),
        in_specs=in_specs,
        out_specs=pl.BlockSpec((tile, PM[-1]), lambda g: (g, 0)),
        scratch_shapes=[pltpu.VMEM((tile, PK[0]), jnp.bfloat16)],
        compiler_params=pltpu.CompilerParams(
            dimension_semantics=("parallel",),       # v7x: 2 TCs split the batch axis
            vmem_limit_bytes=64 * 1024 * 1024),      # actual use ~12 MiB at tile_n=1024
    )(*inputs)

    return out_pad[:n, :1].astype(jnp.float32).reshape(n, 1, 1)


def reference_forward(x, params, bns):
    """Pure-JAX f32 eval-mode reference of the PyTorch module."""
    h = x.reshape(x.shape[0], IN_DIM)
    for i in range(N_LAYERS):
        W, b = params[i]
        h = h @ W.T + b
        if i < N_BN:
            g, bt, m, v = bns[i]
            h = (h - m) / jnp.sqrt(v + BN_EPS) * g + bt
            h = jnp.maximum(h, 0.0) if i < 6 else jnp.clip(h, 0.0, 6.0)
        else:
            h = jax.nn.sigmoid(h)
    return h.reshape(x.shape[0], 1, 1)


def reference_forward_kernelprec(x, w_slabs, b_slab):
    """Pure-JAX reference at the kernel's precision (bf16 activations/weights/output,
    f32 accumulation), using the same packed slabs the kernel sees."""
    n = x.shape[0]
    h = jnp.zeros((n, PK[0]), jnp.bfloat16).at[:, :IN_DIM].set(
        x.reshape(n, IN_DIM).astype(jnp.bfloat16))
    for i in range(N_LAYERS):
        s, off = W_SLOT[i]
        w = w_slabs[s][:, off:off + PM[i]]
        b = b_slab[i:i + 1, :PM[i]]
        acc = jnp.dot(h, w, preferred_element_type=jnp.float32) + b
        if i < N_BN:
            h = (jnp.maximum(acc, 0.0) if i < 6
                 else jnp.clip(acc, 0.0, 6.0)).astype(jnp.bfloat16)
        else:
            h = jax.nn.sigmoid(acc)
    out = h.astype(jnp.bfloat16)
    return out[:, :1].astype(jnp.float32).reshape(n, 1, 1)


if __name__ == "__main__":
    key = jax.random.PRNGKey(0)
    k_x, k_p = jax.random.split(key)

    batch = 8
    x = jax.random.normal(k_x, (batch, 1, DIMS[0]), jnp.float32)

    params, bns = init_params(k_p)
    w_slabs, b_slab = pack_params(params, bns)

    out = cnnetwork_long50_forward(x, w_slabs, b_slab)
    out = jax.block_until_ready(out)
    assert out.shape == (batch, 1, 1), out.shape

    # Exactness of the kernel itself (same bf16 precision, incl. the bf16 output cast):
    ref_kp = reference_forward_kernelprec(x, w_slabs, b_slab)
    err_kp = float(jnp.max(jnp.abs(out - ref_kp)))
    assert err_kp < 5e-3, f"kernel-precision mismatch, max abs err {err_kp}"

    # Semantics vs. the f32 eval-mode PyTorch module (relaxed: bf16 weights/activations):
    ref_f32 = reference_forward(x, params, bns)
    err_f32 = float(jnp.max(jnp.abs(out - ref_f32)))
    assert err_f32 < 5e-2, f"f32-semantics mismatch, max abs err {err_f32}"

    print("KERNEL_OK")
</pallas_src>

<mosaic_0001>
module attributes {stable_mosaic.version = 11 : i64} {
  func.func @mlp_kernel(%arg0: i32, %arg1: memref<8x403xf32, #tpu.memory_space<vmem>>, %arg2: memref<512x384xbf16, #tpu.memory_space<vmem>>, %arg3: memref<384x640xbf16, #tpu.memory_space<vmem>>, %arg4: memref<256x640xbf16, #tpu.memory_space<vmem>>, %arg5: memref<128x512xbf16, #tpu.memory_space<vmem>>, %arg6: memref<16x384xf32, #tpu.memory_space<vmem>>, %arg7: memref<8x128xbf16, #tpu.memory_space<vmem>>, %arg8: memref<8x512xbf16, #tpu.memory_space<vmem>>) attributes {dimension_semantics = [#tpu.dimension_semantics<parallel>], iteration_bounds = array<i64: 1>, scalar_prefetch = 0 : i64, scratch_operands = 1 : i64, tpu.core_type = #tpu.core_type<tc>, window_params = [{transform_indices = @transform_0, window_bounds = array<i64: 8, 403>}, {pipeline_mode = #tpu.pipeline_mode<synchronous>, transform_indices = @transform_1, window_bounds = array<i64: 512, 384>}, {pipeline_mode = #tpu.pipeline_mode<synchronous>, transform_indices = @transform_2, window_bounds = array<i64: 384, 640>}, {pipeline_mode = #tpu.pipeline_mode<synchronous>, transform_indices = @transform_3, window_bounds = array<i64: 256, 640>}, {pipeline_mode = #tpu.pipeline_mode<synchronous>, transform_indices = @transform_4, window_bounds = array<i64: 128, 512>}, {pipeline_mode = #tpu.pipeline_mode<synchronous>, transform_indices = @transform_5, window_bounds = array<i64: 16, 384>}, {transform_indices = @transform_6, window_bounds = array<i64: 8, 128>}]} {
    %cst = arith.constant 0.000000e+00 : bf16
    %0 = vector.broadcast %cst : bf16 to vector<8x128xbf16>
    %c0 = arith.constant 0 : index
    %c384 = arith.constant 384 : index
    %1 = vector.load %arg8[%c0, %c384] : memref<8x512xbf16, #tpu.memory_space<vmem>>, vector<8x128xbf16>
    tpu.vector_store %arg8[%c0, %c384], %0 {strides = array<i32>} : memref<8x512xbf16, #tpu.memory_space<vmem>>, vector<8x128xbf16>,
    %c0_0 = arith.constant 0 : index
    %c0_1 = arith.constant 0 : index
    %2 = vector.load %arg1[%c0_0, %c0_1] : memref<8x403xf32, #tpu.memory_space<vmem>>, vector<8x403xf32>
    %3 = arith.truncf %2 : vector<8x403xf32> to vector<8x403xbf16>
    %c0_2 = arith.constant 0 : index
    %c0_3 = arith.constant 0 : index
    %4 = vector.load %arg8[%c0_2, %c0_3] : memref<8x512xbf16, #tpu.memory_space<vmem>>, vector<8x403xbf16>
    tpu.vector_store %arg8[%c0_2, %c0_3], %3 {strides = array<i32>} : memref<8x512xbf16, #tpu.memory_space<vmem>>, vector<8x403xbf16>,
    %c0_4 = arith.constant 0 : index
    %c0_5 = arith.constant 0 : index
    %5 = vector.load %arg8[%c0_4, %c0_5] : memref<8x512xbf16, #tpu.memory_space<vmem>>, vector<8x512xbf16>
    %c0_6 = arith.constant 0 : index
    %c0_7 = arith.constant 0 : index
    %6 = vector.load %arg2[%c0_6, %c0_7] : memref<512x384xbf16, #tpu.memory_space<vmem>>, vector<512x384xbf16>
    %c0_8 = arith.constant 0 : index
    %c0_9 = arith.constant 0 : index
    %7 = vector.load %arg6[%c0_8, %c0_9] : memref<16x384xf32, #tpu.memory_space<vmem>>, vector<1x384xf32>
    %cst_10 = arith.constant dense<0.000000e+00> : vector<8x384xf32>
    %8 = tpu.matmul %5, %6, %cst_10 {dimension_numbers = #tpu.dot_dimension_numbers<[1], [0], [0], [1], [0, 0, 1, 1], [], []>} : vector<8x512xbf16>, vector<512x384xbf16>, vector<8x384xf32> -> vector<8x384xf32>
    %9 = vector.broadcast %7 : vector<1x384xf32> to vector<8x384xf32>
    %10 = arith.addf %8, %9 : vector<8x384xf32>
    %cst_11 = arith.constant 0.000000e+00 : f32
    %11 = vector.broadcast %cst_11 : f32 to vector<8x384xf32>
    %12 = arith.maximumf %10, %11 : vector<8x384xf32>
    %13 = arith.truncf %12 : vector<8x384xf32> to vector<8x384xbf16>
    %c0_12 = arith.constant 0 : index
    %c0_13 = arith.constant 0 : index
    %14 = vector.load %arg3[%c0_12, %c0_13] : memref<384x640xbf16, #tpu.memory_space<vmem>>, vector<384x384xbf16>
    %c1 = arith.constant 1 : index
    %c0_14 = arith.constant 0 : index
    %15 = vector.load %arg6[%c1, %c0_14] : memref<16x384xf32, #tpu.memory_space<vmem>>, vector<1x384xf32>
    %cst_15 = arith.constant dense<0.000000e+00> : vector<8x384xf32>
    %16 = tpu.matmul %13, %14, %cst_15 {dimension_numbers = #tpu.dot_dimension_numbers<[1], [0], [0], [1], [0, 0, 1, 1], [], []>} : vector<8x384xbf16>, vector<384x384xbf16>, vector<8x384xf32> -> vector<8x384xf32>
    %17 = vector.broadcast %15 : vector<1x384xf32> to vector<8x384xf32>
    %18 = arith.addf %16, %17 : vector<8x384xf32>
    %cst_16 = arith.constant 0.000000e+00 : f32
    %19 = vector.broadcast %cst_16 : f32 to vector<8x384xf32>
    %20 = arith.maximumf %18, %19 : vector<8x384xf32>
    %21 = arith.truncf %20 : vector<8x384xf32> to vector<8x384xbf16>
    %c0_17 = arith.constant 0 : index
    %c384_18 = arith.constant 384 : index
    %22 = vector.load %arg3[%c0_17, %c384_18] : memref<384x640xbf16, #tpu.memory_space<vmem>>, vector<384x256xbf16>
    %c2 = arith.constant 2 : index
    %c0_19 = arith.constant 0 : index
    %23 = vector.load %arg6[%c2, %c0_19] : memref<16x384xf32, #tpu.memory_space<vmem>>, vector<1x256xf32>
    %cst_20 = arith.constant dense<0.000000e+00> : vector<8x256xf32>
    %24 = tpu.matmul %21, %22, %cst_20 {dimension_numbers = #tpu.dot_dimension_numbers<[1], [0], [0], [1], [0, 0, 1, 1], [], []>} : vector<8x384xbf16>, vector<384x256xbf16>, vector<8x256xf32> -> vector<8x256xf32>
    %25 = vector.broadcast %23 : vector<1x256xf32> to vector<8x256xf32>
    %26 = arith.addf %24, %25 : vector<8x256xf32>
    %cst_21 = arith.constant 0.000000e+00 : f32
    %27 = vector.broadcast %cst_21 : f32 to vector<8x256xf32>
    %28 = arith.maximumf %26, %27 : vector<8x256xf32>
    %29 = arith.truncf %28 : vector<8x256xf32> to vector<8x256xbf16>
    %c0_22 = arith.constant 0 : index
    %c0_23 = arith.constant 0 : index
    %30 = vector.load %arg4[%c0_22, %c0_23] : memref<256x640xbf16, #tpu.memory_space<vmem>>, vector<256x256xbf16>
    %c3 = arith.constant 3 : index
    %c0_24 = arith.constant 0 : index
    %31 = vector.load %arg6[%c3, %c0_24] : memref<16x384xf32, #tpu.memory_space<vmem>>, vector<1x256xf32>
    %cst_25 = arith.constant dense<0.000000e+00> : vector<8x256xf32>
    %32 = tpu.matmul %29, %30, %cst_25 {dimension_numbers = #tpu.dot_dimension_numbers<[1], [0], [0], [1], [0, 0, 1, 1], [], []>} : vector<8x256xbf16>, vector<256x256xbf16>, vector<8x256xf32> -> vector<8x256xf32>
    %33 = vector.broadcast %31 : vector<1x256xf32> to vector<8x256xf32>
    %34 = arith.addf %32, %33 : vector<8x256xf32>
    %cst_26 = arith.constant 0.000000e+00 : f32
    %35 = vector.broadcast %cst_26 : f32 to vector<8x256xf32>
    %36 = arith.maximumf %34, %35 : vector<8x256xf32>
    %37 = arith.truncf %36 : vector<8x256xf32> to vector<8x256xbf16>
    %c0_27 = arith.constant 0 : index
    %c256 = arith.constant 256 : index
    %38 = vector.load %arg4[%c0_27, %c256] : memref<256x640xbf16, #tpu.memory_space<vmem>>, vector<256x256xbf16>
    %c4 = arith.constant 4 : index
    %c0_28 = arith.constant 0 : index
    %39 = vector.load %arg6[%c4, %c0_28] : memref<16x384xf32, #tpu.memory_space<vmem>>, vector<1x256xf32>
    %cst_29 = arith.constant dense<0.000000e+00> : vector<8x256xf32>
    %40 = tpu.matmul %37, %38, %cst_29 {dimension_numbers = #tpu.dot_dimension_numbers<[1], [0], [0], [1], [0, 0, 1, 1], [], []>} : vector<8x256xbf16>, vector<256x256xbf16>, vector<8x256xf32> -> vector<8x256xf32>
    %41 = vector.broadcast %39 : vector<1x256xf32> to vector<8x256xf32>
    %42 = arith.addf %40, %41 : vector<8x256xf32>
    %cst_30 = arith.constant 0.000000e+00 : f32
    %43 = vector.broadcast %cst_30 : f32 to vector<8x256xf32>
    %44 = arith.maximumf %42, %43 : vector<8x256xf32>
    %45 = arith.truncf %44 : vector<8x256xf32> to vector<8x256xbf16>
    %c0_31 = arith.constant 0 : index
    %c512 = arith.constant 512 : index
    %46 = vector.load %arg4[%c0_31, %c512] : memref<256x640xbf16, #tpu.memory_space<vmem>>, vector<256x128xbf16>
    %c5 = arith.constant 5 : index
    %c0_32 = arith.constant 0 : index
    %47 = vector.load %arg6[%c5, %c0_32] : memref<16x384xf32, #tpu.memory_space<vmem>>, vector<1x128xf32>
    %cst_33 = arith.constant dense<0.000000e+00> : vector<8x128xf32>
    %48 = tpu.matmul %45, %46, %cst_33 {dimension_numbers = #tpu.dot_dimension_numbers<[1], [0], [0], [1], [0, 0, 1, 1], [], []>} : vector<8x256xbf16>, vector<256x128xbf16>, vector<8x128xf32> -> vector<8x128xf32>
    %49 = vector.broadcast %47 : vector<1x128xf32> to vector<8x128xf32>
    %50 = arith.addf %48, %49 : vector<8x128xf32>
    %cst_34 = arith.constant 0.000000e+00 : f32
    %51 = vector.broadcast %cst_34 : f32 to vector<8x128xf32>
    %52 = arith.maximumf %50, %51 : vector<8x128xf32>
    %53 = arith.truncf %52 : vector<8x128xf32> to vector<8x128xbf16>
    %c0_35 = arith.constant 0 : index
    %c0_36 = arith.constant 0 : index
    %54 = vector.load %arg5[%c0_35, %c0_36] : memref<128x512xbf16, #tpu.memory_space<vmem>>, vector<128x128xbf16>
    %c6 = arith.constant 6 : index
    %c0_37 = arith.constant 0 : index
    %55 = vector.load %arg6[%c6, %c0_37] : memref<16x384xf32, #tpu.memory_space<vmem>>, vector<1x128xf32>
    %cst_38 = arith.constant dense<0.000000e+00> : vector<8x128xf32>
    %56 = tpu.matmul %53, %54, %cst_38 {dimension_numbers = #tpu.dot_dimension_numbers<[1], [0], [0], [1], [0, 0, 1, 1], [], []>} : vector<8x128xbf16>, vector<128x128xbf16>, vector<8x128xf32> -> vector<8x128xf32>
    %57 = vector.broadcast %55 : vector<1x128xf32> to vector<8x128xf32>
    %58 = arith.addf %56, %57 : vector<8x128xf32>
    %cst_39 = arith.constant 0.000000e+00 : f32
    %cst_40 = arith.constant 6.000000e+00 : f32
    %59 = vector.broadcast %cst_39 : f32 to vector<8x128xf32>
    %60 = arith.maximumf %59, %58 : vector<8x128xf32>
    %61 = vector.broadcast %cst_40 : f32 to vector<8x128xf32>
    %62 = arith.minimumf %61, %60 : vector<8x128xf32>
    %63 = arith.truncf %62 : vector<8x128xf32> to vector<8x128xbf16>
    %c0_41 = arith.constant 0 : index
    %c128 = arith.constant 128 : index
    %64 = vector.load %arg5[%c0_41, %c128] : memref<128x512xbf16, #tpu.memory_space<vmem>>, vector<128x128xbf16>
    %c7 = arith.constant 7 : index
    %c0_42 = arith.constant 0 : index
    %65 = vector.load %arg6[%c7, %c0_42] : memref<16x384xf32, #tpu.memory_space<vmem>>, vector<1x128xf32>
    %cst_43 = arith.constant dense<0.000000e+00> : vector<8x128xf32>
    %66 = tpu.matmul %63, %64, %cst_43 {dimension_numbers = #tpu.dot_dimension_numbers<[1], [0], [0], [1], [0, 0, 1, 1], [], []>} : vector<8x128xbf16>, vector<128x128xbf16>, vector<8x128xf32> -> vector<8x128xf32>
    %67 = vector.broadcast %65 : vector<1x128xf32> to vector<8x128xf32>
    %68 = arith.addf %66, %67 : vector<8x128xf32>
    %cst_44 = arith.constant 0.000000e+00 : f32
    %cst_45 = arith.constant 6.000000e+00 : f32
    %69 = vector.broadcast %cst_44 : f32 to vector<8x128xf32>
    %70 = arith.maximumf %69, %68 : vector<8x128xf32>
    %71 = vector.broadcast %cst_45 : f32 to vector<8x128xf32>
    %72 = arith.minimumf %71, %70 : vector<8x128xf32>
    %73 = arith.truncf %72 : vector<8x128xf32> to vector<8x128xbf16>
    %c0_46 = arith.constant 0 : index
    %c256_47 = arith.constant 256 : index
    %74 = vector.load %arg5[%c0_46, %c256_47] : memref<128x512xbf16, #tpu.memory_space<vmem>>, vector<128x128xbf16>
    %c8 = arith.constant 8 : index
    %c0_48 = arith.constant 0 : index
    %75 = vector.load %arg6[%c8, %c0_48] : memref<16x384xf32, #tpu.memory_space<vmem>>, vector<1x128xf32>
    %cst_49 = arith.constant dense<0.000000e+00> : vector<8x128xf32>
    %76 = tpu.matmul %73, %74, %cst_49 {dimension_numbers = #tpu.dot_dimension_numbers<[1], [0], [0], [1], [0, 0, 1, 1], [], []>} : vector<8x128xbf16>, vector<128x128xbf16>, vector<8x128xf32> -> vector<8x128xf32>
    %77 = vector.broadcast %75 : vector<1x128xf32> to vector<8x128xf32>
    %78 = arith.addf %76, %77 : vector<8x128xf32>
    %cst_50 = arith.constant 0.000000e+00 : f32
    %cst_51 = arith.constant 6.000000e+00 : f32
    %79 = vector.broadcast %cst_50 : f32 to vector<8x128xf32>
    %80 = arith.maximumf %79, %78 : vector<8x128xf32>
    %81 = vector.broadcast %cst_51 : f32 to vector<8x128xf32>
    %82 = arith.minimumf %81, %80 : vector<8x128xf32>
    %83 = arith.truncf %82 : vector<8x128xf32> to vector<8x128xbf16>
    %c0_52 = arith.constant 0 : index
    %c384_53 = arith.constant 384 : index
    %84 = vector.load %arg5[%c0_52, %c384_53] : memref<128x512xbf16, #tpu.memory_space<vmem>>, vector<128x128xbf16>
    %c9 = arith.constant 9 : index
    %c0_54 = arith.constant 0 : index
    %85 = vector.load %arg6[%c9, %c0_54] : memref<16x384xf32, #tpu.memory_space<vmem>>, vector<1x128xf32>
    %cst_55 = arith.constant dense<0.000000e+00> : vector<8x128xf32>
    %86 = tpu.matmul %83, %84, %cst_55 {dimension_numbers = #tpu.dot_dimension_numbers<[1], [0], [0], [1], [0, 0, 1, 1], [], []>} : vector<8x128xbf16>, vector<128x128xbf16>, vector<8x128xf32> -> vector<8x128xf32>
    %87 = vector.broadcast %85 : vector<1x128xf32> to vector<8x128xf32>
    %88 = arith.addf %86, %87 : vector<8x128xf32>
    %89 = arith.negf %88 : vector<8x128xf32>
    %90 = math.exp %89 : vector<8x128xf32>
    %cst_56 = arith.constant 1.000000e+00 : f32
    %91 = vector.broadcast %cst_56 : f32 to vector<8x128xf32>
    %92 = arith.addf %91, %90 : vector<8x128xf32>
    %93 = arith.divf %91, %92 : vector<8x128xf32>
    %94 = arith.truncf %93 : vector<8x128xf32> to vector<8x128xbf16>
    %c0_57 = arith.constant 0 : index
    %c0_58 = arith.constant 0 : index
    %95 = vector.load %arg7[%c0_57, %c0_58] : memref<8x128xbf16, #tpu.memory_space<vmem>>, vector<8x128xbf16>
    tpu.vector_store %arg7[%c0_57, %c0_58], %94 {strides = array<i32>} : memref<8x128xbf16, #tpu.memory_space<vmem>>, vector<8x128xbf16>,
    return
  }
  func.func @transform_0(%arg0: i32) -> (i32, i32) {
    %c0_i32 = arith.constant 0 : i32
    %c0_i32_0 = arith.constant 0 : i32
    return %arg0, %c0_i32 : i32, i32
  }
  func.func @transform_1(%arg0: i32) -> (i32, i32) {
    %c0_i32 = arith.constant 0 : i32
    %c0_i32_0 = arith.constant 0 : i32
    %c0_i32_1 = arith.constant 0 : i32
    return %c0_i32, %c0_i32_0 : i32, i32
  }
  func.func @transform_2(%arg0: i32) -> (i32, i32) {
    %c0_i32 = arith.constant 0 : i32
    %c0_i32_0 = arith.constant 0 : i32
    %c0_i32_1 = arith.constant 0 : i32
    return %c0_i32, %c0_i32_0 : i32, i32
  }
  func.func @transform_3(%arg0: i32) -> (i32, i32) {
    %c0_i32 = arith.constant 0 : i32
    %c0_i32_0 = arith.constant 0 : i32
    %c0_i32_1 = arith.constant 0 : i32
    return %c0_i32, %c0_i32_0 : i32, i32
  }
  func.func @transform_4(%arg0: i32) -> (i32, i32) {
    %c0_i32 = arith.constant 0 : i32
    %c0_i32_0 = arith.constant 0 : i32
    %c0_i32_1 = arith.constant 0 : i32
    return %c0_i32, %c0_i32_0 : i32, i32
  }
  func.func @transform_5(%arg0: i32) -> (i32, i32) {
    %c0_i32 = arith.constant 0 : i32
    %c0_i32_0 = arith.constant 0 : i32
    %c0_i32_1 = arith.constant 0 : i32
    return %c0_i32, %c0_i32_0 : i32, i32
  }
  func.func @transform_6(%arg0: i32) -> (i32, i32) {
    %c0_i32 = arith.constant 0 : i32
    %c0_i32_0 = arith.constant 0 : i32
    return %arg0, %c0_i32 : i32, i32
  }
}

</mosaic_0001>

<llo_original>
// kernel: tpu_custom_call.1
$region0: #{tpu_custom_call.1}
  #allocation0 [shape = 'u32[]', space=smem, size = 0x4, offset = 0x4, fixed_abs, tag = 'smem constant byte address 0x4 - core index']
  #allocation1 [shape = 'u32[144,128]{1,0:T(1,128)}', space=vmem, size = 0x12000, scoped, tag = 'internal scratch']
  #allocation2 [shape = 'bf16[8,512]{1,0:T(8,128)(2,1)}', space=vmem, size = 0x2000, scoped, tag = 'scratch operand']
  %s0 = inlined_call_operand.hbm [shape: f32[8,403], index: 0, kind: input, shape index: {}]
  %s1 = inlined_call_operand.hbm [shape: bf16[512,384], index: 1, kind: input, shape index: {}]
  %s2 = inlined_call_operand.hbm [shape: bf16[384,640], index: 2, kind: input, shape index: {}]
  %s3 = inlined_call_operand.hbm [shape: bf16[256,640], index: 3, kind: input, shape index: {}]
  %s4 = inlined_call_operand.hbm [shape: bf16[128,512], index: 4, kind: input, shape index: {}]
  %s5 = inlined_call_operand.hbm [shape: f32[16,384], index: 5, kind: input, shape index: {}]
  %s6 = inlined_call_operand.hbm [shape: bf16[8,128], index: 6, kind: output, shape index: {}]
  %s7 = sld [smem:[#allocation0]]
  $region58: #{tpu_custom_call.1} parent=0
    _
  %s9 = ssub.s32 1, %s7
  %s10 = scalar_select 0, %s9, %s7
  $region1: #{tpu_custom_call.1} parent=0
    #allocation3 [shape = 'u8[16384]{0}', space=vmem, size = 0x4000, scoped, tag = 'input window, operand 0, single buffered']
    #allocation4 [shape = 's32[1]{0}', space=sflag, size = 0x4, scoped, tag = 'scoped memory for tpu_custom_call.1']
    #allocation5 [shape = 's32[1]{0}', space=sflag, size = 0x4, scoped, tag = 'scoped memory for tpu_custom_call.1']
    #allocation6 [shape = 'u8[393216]{0}', space=vmem, size = 0x60000, scoped, tag = 'input window, operand 1, single buffered']
    #allocation7 [shape = 's32[1]{0}', space=sflag, size = 0x4, scoped, tag = 'scoped memory for tpu_custom_call.1']
    #allocation8 [shape = 'u8[491520]{0}', space=vmem, size = 0x78000, scoped, tag = 'input window, operand 2, single buffered']
    #allocation9 [shape = 'u8[327680]{0}', space=vmem, size = 0x50000, scoped, tag = 'input window, operand 3, single buffered']
    #allocation10 [shape = 's32[1]{0}', space=sflag, size = 0x4, scoped, tag = 'scoped memory for tpu_custom_call.1']
    #allocation11 [shape = 'u8[131072]{0}', space=vmem, size = 0x20000, scoped, tag = 'input window, operand 4, single buffered']
    #allocation12 [shape = 'u8[24576]{0}', space=vmem, size = 0x6000, scoped, tag = 'input window, operand 5, single buffered']
    #allocation13 [shape = 's32[1]{0}', space=sflag, size = 0x4, scoped, tag = 'scoped memory for tpu_custom_call.1']
    #allocation14 [shape = 'u8[2048]{0}', space=vmem, size = 0x800, scoped, tag = 'output window, operand 0, single buffered']
    %11 = vsyncpa [#allocation4], 0
    %12 = vsyncpa [#allocation7], 0
    %13 = vsyncpa [#allocation10], 0
    %14 = vsyncpa [#allocation13], 0
    %15 = vsyncpa [#allocation5], 0
    // Predicated region
    $region2: #{tpu_custom_call.1} parent=1 // pred_check
      _
    $region3: #{tpu_custom_call.1} parent=1 // pred_check_branch
      %17 = sbr.rel (0) target = $region5
    $region4: #{tpu_custom_call.1} parent=1 // pred_region
      %s19 = ssub.s32 512, 512
      %20 = vsyncadd [#allocation4], %s19
      %s22 = sshll.u32 [#allocation3], 4
      %s23 = int_to_ptr.vmem [resolvable:$true] %s22
      %25 = dma.hbm_to_vmem [thread:$0]  %s0, 512, %s23, [#allocation4]
    $region5: #{tpu_custom_call.1} parent=1 // pred_fallthru
      _
    // Predicated region
    $region6: #{tpu_custom_call.1} parent=1 // pred_check
      _
    $region7: #{tpu_custom_call.1} parent=1 // pred_check_branch
      %27 = sbr.rel (0) target = $region9
    $region8: #{tpu_custom_call.1} parent=1 // pred_region
      %s29 = ssub.s32 12288, 12288
      %30 = vsyncadd [#allocation7], %s29
      %s31 = sshll.u32 [#allocation6], 4
      %s32 = int_to_ptr.vmem [resolvable:$true] %s31
      %37 = dma.hbm_to_vmem [thread:$0]  %s1, 12288, %s32, [#allocation7], 192, 192, 12
    $region9: #{tpu_custom_call.1} parent=1 // pred_fallthru
      _
    // Predicated region
    $region10: #{tpu_custom_call.1} parent=1 // pred_check
      _
    $region11: #{tpu_custom_call.1} parent=1 // pred_check_branch
      %39 = sbr.rel (0) target = $region13
    $region12: #{tpu_custom_call.1} parent=1 // pred_region
      %s41 = ssub.s32 15360, 15360
      %42 = vsyncadd [#allocation7], %s41
      %s43 = sshll.u32 [#allocation8], 4
      %s44 = int_to_ptr.vmem [resolvable:$true] %s43
      %49 = dma.hbm_to_vmem [thread:$0]  %s2, 15360, %s44, [#allocation7], 320, 320, 20
    $region13: #{tpu_custom_call.1} parent=1 // pred_fallthru
      _
    // Predicated region
    $region14: #{tpu_custom_call.1} parent=1 // pred_check
      _
    $region15: #{tpu_custom_call.1} parent=1 // pred_check_branch
      %51 = sbr.rel (0) target = $region17
    $region16: #{tpu_custom_call.1} parent=1 // pred_region
      %s53 = ssub.s32 10240, 10240
      %54 = vsyncadd [#allocation10], %s53
      %s55 = sshll.u32 [#allocation9], 4
      %s56 = int_to_ptr.vmem [resolvable:$true] %s55
      %61 = dma.hbm_to_vmem [thread:$0]  %s3, 10240, %s56, [#allocation10], 320, 320, 20
    $region17: #{tpu_custom_call.1} parent=1 // pred_fallthru
      _
    // Predicated region
    $region18: #{tpu_custom_call.1} parent=1 // pred_check
      _
    $region19: #{tpu_custom_call.1} parent=1 // pred_check_branch
      %63 = sbr.rel (0) target = $region21
    $region20: #{tpu_custom_call.1} parent=1 // pred_region
      %s65 = ssub.s32 4096, 4096
      %66 = vsyncadd [#allocation10], %s65
      %s67 = sshll.u32 [#allocation11], 4
      %s68 = int_to_ptr.vmem [resolvable:$true] %s67
      %73 = dma.hbm_to_vmem [thread:$0]  %s4, 4096, %s68, [#allocation10], 256, 256, 16
    $region21: #{tpu_custom_call.1} parent=1 // pred_fallthru
      _
    // Predicated region
    $region22: #{tpu_custom_call.1} parent=1 // pred_check
      _
    $region23: #{tpu_custom_call.1} parent=1 // pred_check_branch
      %75 = sbr.rel (0) target = $region25
    $region24: #{tpu_custom_call.1} parent=1 // pred_region
      %s77 = ssub.s32 768, 768
      %78 = vsyncadd [#allocation13], %s77
      %s79 = sshll.u32 [#allocation12], 4
      %s80 = int_to_ptr.vmem [resolvable:$true] %s79
      %85 = dma.hbm_to_vmem [thread:$0]  %s5, 768, %s80, [#allocation13], 384, 384, 24
    $region25: #{tpu_custom_call.1} parent=1 // pred_fallthru
      _
    // Predicated region
    $region26: #{tpu_custom_call.1} parent=1 // pred_check
      _
    $region27: #{tpu_custom_call.1} parent=1 // pred_check_branch
      %87 = sbr.rel (0) target = $region29
    $region28: #{tpu_custom_call.1} parent=1 // pred_region
      %88 = dma.done [#allocation4], 512
    $region29: #{tpu_custom_call.1} parent=1 // pred_fallthru
      _
    // Predicated region
    $region30: #{tpu_custom_call.1} parent=1 // pred_check
      _
    $region31: #{tpu_custom_call.1} parent=1 // pred_check_branch
      %90 = sbr.rel (0) target = $region33
    $region32: #{tpu_custom_call.1} parent=1 // pred_region
      %91 = dma.done [#allocation7], 12288
    $region33: #{tpu_custom_call.1} parent=1 // pred_fallthru
      _
    // Predicated region
    $region34: #{tpu_custom_call.1} parent=1 // pred_check
      _
    $region35: #{tpu_custom_call.1} parent=1 // pred_check_branch
      %93 = sbr.rel (0) target = $region37
    $region36: #{tpu_custom_call.1} parent=1 // pred_region
      %94 = dma.done [#allocation7], 15360
    $region37: #{tpu_custom_call.1} parent=1 // pred_fallthru
      _
    // Predicated region
    $region38: #{tpu_custom_call.1} parent=1 // pred_check
      _
    $region39: #{tpu_custom_call.1} parent=1 // pred_check_branch
      %96 = sbr.rel (0) target = $region41
    $region40: #{tpu_custom_call.1} parent=1 // pred_region
      %97 = dma.done [#allocation10], 10240
    $region41: #{tpu_custom_call.1} parent=1 // pred_fallthru
      _
    // Predicated region
    $region42: #{tpu_custom_call.1} parent=1 // pred_check
      _
    $region43: #{tpu_custom_call.1} parent=1 // pred_check_branch
      %99 = sbr.rel (0) target = $region45
    $region44: #{tpu_custom_call.1} parent=1 // pred_region
      %100 = dma.done [#allocation10], 4096
    $region45: #{tpu_custom_call.1} parent=1 // pred_fallthru
      _
    // Predicated region
    $region46: #{tpu_custom_call.1} parent=1 // pred_check
      _
    $region47: #{tpu_custom_call.1} parent=1 // pred_check_branch
      %102 = sbr.rel (0) target = $region49
    $region48: #{tpu_custom_call.1} parent=1 // pred_region
      %103 = dma.done [#allocation13], 768
    $region49: #{tpu_custom_call.1} parent=1 // pred_fallthru
      _
    %105 = vst [vmem:[#allocation2 + $0xc] sm:$0xf] 0
    %v106 = vld [vmem:[#allocation3] sm:$0xff]
    %v107 = vld [vmem:[#allocation3 + $0x8] sm:$0xff]
    %v108 = vld [vmem:[#allocation3 + $0x10] sm:$0xff]
    %v109 = vld [vmem:[#allocation3 + $0x18] sm:$0xff]
    %v110 = vpack.c.bf16 %v106, %v106
    %v111 = vpack.c.bf16 %v107, %v107
    %v112 = vpack.c.bf16 %v108, %v108
    %v113 = vpack.c.bf16 %v109, %v109
    %v118 = vunpack.c.l.b16 %v110
    %v119 = vunpack.c.l.b16 %v111
    %v120 = vunpack.c.l.b16 %v112
    %v121 = vunpack.c.l.b16 %v113
    %v122 = vpack.c.b16 %v119, %v118
    %v123 = vpack.c.b16 %v121, %v120
    %126 = vst [vmem:[#allocation2] sm:$0xff] %v122
    %vm127 = vcmask 1043456
    %vm128 = vcmask 154628
    %vm129 = vmor %vm128, %vm127
    %130 = vst.msk [vmem:[#allocation2 + $0x8] sm:$0xff] %vm129, %v123
    %v131 = vld [vmem:[#allocation2] sm:$0xff]
    %v132 = vld [vmem:[#allocation2 + $0x8] sm:$0xff]
    %v133 = vld [vmem:[#allocation6] sm:$0xff]
    %v134 = vld [vmem:[#allocation6 + $0x8] sm:$0xf]
    %v135 = vld [vmem:[#allocation6 + $0xc] sm:$0xff]
    %v136 = vld [vmem:[#allocation6 + $0x14] sm:$0xf]
    %v137 = vld [vmem:[#allocation6 + $0x18] sm:$0xff]
    %v138 = vld [vmem:[#allocation6 + $0x20] sm:$0xf]
    %v139 = vld [vmem:[#allocation6 + $0x24] sm:$0xff]
    %v140 = vld [vmem:[#allocation6 + $0x2c] sm:$0xf]
    %v141 = vld [vmem:[#allocation6 + $0x30] sm:$0xff]
    %v142 = vld [vmem:[#allocation6 + $0x38] sm:$0xf]
    %v143 = vld [vmem:[#allocation6 + $0x3c] sm:$0xff]
    %v144 = vld [vmem:[#allocation6 + $0x44] sm:$0xf]
    %v145 = vld [vmem:[#allocation6 + $0x48] sm:$0xff]
    %v146 = vld [vmem:[#allocation6 + $0x50] sm:$0xf]
    %v147 = vld [vmem:[#allocation6 + $0x54] sm:$0xff]
    %v148 = vld [vmem:[#allocation6 + $0x5c] sm:$0xf]
    %v149 = vld [vmem:[#allocation6 + $0x60] sm:$0xff]
    %v150 = vld [vmem:[#allocation6 + $0x68] sm:$0xf]
    %v151 = vld [vmem:[#allocation6 + $0x6c] sm:$0xff]
    %v152 = vld [vmem:[#allocation6 + $0x74] sm:$0xf]
    %v153 = vld [vmem:[#allocation6 + $0x78] sm:$0xff]
    %v154 = vld [vmem:[#allocation6 + $0x80] sm:$0xf]
    %v155 = vld [vmem:[#allocation6 + $0x84] sm:$0xff]
    %v156 = vld [vmem:[#allocation6 + $0x8c] sm:$0xf]
    %v157 = vld [vmem:[#allocation6 + $0x90] sm:$0xff]
    %v158 = vld [vmem:[#allocation6 + $0x98] sm:$0xf]
    %v159 = vld [vmem:[#allocation6 + $0x9c] sm:$0xff]
    %v160 = vld [vmem:[#allocation6 + $0xa4] sm:$0xf]
    %v161 = vld [vmem:[#allocation6 + $0xa8] sm:$0xff]
    %v162 = vld [vmem:[#allocation6 + $0xb0] sm:$0xf]
    %v163 = vld [vmem:[#allocation6 + $0xb4] sm:$0xff]
    %v164 = vld [vmem:[#allocation6 + $0xbc] sm:$0xf]
    %v165 = vld [vmem:[#allocation6 + $0xc0] sm:$0xff]
    %v166 = vld [vmem:[#allocation6 + $0xc8] sm:$0xf]
    %v167 = vld [vmem:[#allocation6 + $0xcc] sm:$0xff]
    %v168 = vld [vmem:[#allocation6 + $0xd4] sm:$0xf]
    %v169 = vld [vmem:[#allocation6 + $0xd8] sm:$0xff]
    %v170 = vld [vmem:[#allocation6 + $0xe0] sm:$0xf]
    %v171 = vld [vmem:[#allocation6 + $0xe4] sm:$0xff]
    %v172 = vld [vmem:[#allocation6 + $0xec] sm:$0xf]
    %v173 = vld [vmem:[#allocation6 + $0xf0] sm:$0xff]
    %v174 = vld [vmem:[#allocation6 + $0xf8] sm:$0xf]
    %v175 = vld [vmem:[#allocation6 + $0xfc] sm:$0xff]
    %v176 = vld [vmem:[#allocation6 + $0x104] sm:$0xf]
    %v177 = vld [vmem:[#allocation6 + $0x108] sm:$0xff]
    %v178 = vld [vmem:[#allocation6 + $0x110] sm:$0xf]
    %v179 = vld [vmem:[#allocation6 + $0x114] sm:$0xff]
    %v180 = vld [vmem:[#allocation6 + $0x11c] sm:$0xf]
    %v181 = vld [vmem:[#allocation6 + $0x120] sm:$0xff]
    %v182 = vld [vmem:[#allocation6 + $0x128] sm:$0xf]
    %v183 = vld [vmem:[#allocation6 + $0x12c] sm:$0xff]
    %v184 = vld [vmem:[#allocation6 + $0x134] sm:$0xf]
    %v185 = vld [vmem:[#allocation6 + $0x138] sm:$0xff]
    %v186 = vld [vmem:[#allocation6 + $0x140] sm:$0xf]
    %v187 = vld [vmem:[#allocation6 + $0x144] sm:$0xff]
    %v188 = vld [vmem:[#allocation6 + $0x14c] sm:$0xf]
    %v189 = vld [vmem:[#allocation6 + $0x150] sm:$0xff]
    %v190 = vld [vmem:[#allocation6 + $0x158] sm:$0xf]
    %v191 = vld [vmem:[#allocation6 + $0x15c] sm:$0xff]
    %v192 = vld [vmem:[#allocation6 + $0x164] sm:$0xf]
    %v193 = vld [vmem:[#allocation6 + $0x168] sm:$0xff]
    %v194 = vld [vmem:[#allocation6 + $0x170] sm:$0xf]
    %v195 = vld [vmem:[#allocation6 + $0x174] sm:$0xff]
    %v196 = vld [vmem:[#allocation6 + $0x17c] sm:$0xf]
    %v197 = vld [vmem:[#allocation6 + $0x180] sm:$0xff]
    %v198 = vld [vmem:[#allocation6 + $0x188] sm:$0xf]
    %v199 = vld [vmem:[#allocation6 + $0x18c] sm:$0xff]
    %v200 = vld [vmem:[#allocation6 + $0x194] sm:$0xf]
    %v201 = vld [vmem:[#allocation6 + $0x198] sm:$0xff]
    %v202 = vld [vmem:[#allocation6 + $0x1a0] sm:$0xf]
    %v203 = vld [vmem:[#allocation6 + $0x1a4] sm:$0xff]
    %v204 = vld [vmem:[#allocation6 + $0x1ac] sm:$0xf]
    %v205 = vld [vmem:[#allocation6 + $0x1b0] sm:$0xff]
    %v206 = vld [vmem:[#allocation6 + $0x1b8] sm:$0xf]
    %v207 = vld [vmem:[#allocation6 + $0x1bc] sm:$0xff]
    %v208 = vld [vmem:[#allocation6 + $0x1c4] sm:$0xf]
    %v209 = vld [vmem:[#allocation6 + $0x1c8] sm:$0xff]
    %v210 = vld [vmem:[#allocation6 + $0x1d0] sm:$0xf]
    %v211 = vld [vmem:[#allocation6 + $0x1d4] sm:$0xff]
    %v212 = vld [vmem:[#allocation6 + $0x1dc] sm:$0xf]
    %v213 = vld [vmem:[#allocation6 + $0x1e0] sm:$0xff]
    %v214 = vld [vmem:[#allocation6 + $0x1e8] sm:$0xf]
    %v215 = vld [vmem:[#allocation6 + $0x1ec] sm:$0xff]
    %v216 = vld [vmem:[#allocation6 + $0x1f4] sm:$0xf]
    %v217 = vld [vmem:[#allocation6 + $0x1f8] sm:$0xff]
    %v218 = vld [vmem:[#allocation6 + $0x200] sm:$0xf]
    %v219 = vld [vmem:[#allocation6 + $0x204] sm:$0xff]
    %v220 = vld [vmem:[#allocation6 + $0x20c] sm:$0xf]
    %v221 = vld [vmem:[#allocation6 + $0x210] sm:$0xff]
    %v222 = vld [vmem:[#allocation6 + $0x218] sm:$0xf]
    %v223 = vld [vmem:[#allocation6 + $0x21c] sm:$0xff]
    %v224 = vld [vmem:[#allocation6 + $0x224] sm:$0xf]
    %v225 = vld [vmem:[#allocation6 + $0x228] sm:$0xff]
    %v226 = vld [vmem:[#allocation6 + $0x230] sm:$0xf]
    %v227 = vld [vmem:[#allocation6 + $0x234] sm:$0xff]
    %v228 = vld [vmem:[#allocation6 + $0x23c] sm:$0xf]
    %v229 = vld [vmem:[#allocation6 + $0x240] sm:$0xff]
    %v230 = vld [vmem:[#allocation6 + $0x248] sm:$0xf]
    %v231 = vld [vmem:[#allocation6 + $0x24c] sm:$0xff]
    %v232 = vld [vmem:[#allocation6 + $0x254] sm:$0xf]
    %v233 = vld [vmem:[#allocation6 + $0x258] sm:$0xff]
    %v234 = vld [vmem:[#allocation6 + $0x260] sm:$0xf]
    %v235 = vld [vmem:[#allocation6 + $0x264] sm:$0xff]
    %v236 = vld [vmem:[#allocation6 + $0x26c] sm:$0xf]
    %v237 = vld [vmem:[#allocation6 + $0x270] sm:$0xff]
    %v238 = vld [vmem:[#allocation6 + $0x278] sm:$0xf]
    %v239 = vld [vmem:[#allocation6 + $0x27c] sm:$0xff]
    %v240 = vld [vmem:[#allocation6 + $0x284] sm:$0xf]
    %v241 = vld [vmem:[#allocation6 + $0x288] sm:$0xff]
    %v242 = vld [vmem:[#allocation6 + $0x290] sm:$0xf]
    %v243 = vld [vmem:[#allocation6 + $0x294] sm:$0xff]
    %v244 = vld [vmem:[#allocation6 + $0x29c] sm:$0xf]
    %v245 = vld [vmem:[#allocation6 + $0x2a0] sm:$0xff]
    %v246 = vld [vmem:[#allocation6 + $0x2a8] sm:$0xf]
    %v247 = vld [vmem:[#allocation6 + $0x2ac] sm:$0xff]
    %v248 = vld [vmem:[#allocation6 + $0x2b4] sm:$0xf]
    %v249 = vld [vmem:[#allocation6 + $0x2b8] sm:$0xff]
    %v250 = vld [vmem:[#allocation6 + $0x2c0] sm:$0xf]
    %v251 = vld [vmem:[#allocation6 + $0x2c4] sm:$0xff]
    %v252 = vld [vmem:[#allocation6 + $0x2cc] sm:$0xf]
    %v253 = vld [vmem:[#allocation6 + $0x2d0] sm:$0xff]
    %v254 = vld [vmem:[#allocation6 + $0x2d8] sm:$0xf]
    %v255 = vld [vmem:[#allocation6 + $0x2dc] sm:$0xff]
    %v256 = vld [vmem:[#allocation6 + $0x2e4] sm:$0xf]
    %v257 = vld [vmem:[#allocation6 + $0x2e8] sm:$0xff]
    %v258 = vld [vmem:[#allocation6 + $0x2f0] sm:$0xf]
    %v259 = vld [vmem:[#allocation6 + $0x2f4] sm:$0xff]
    %v260 = vld [vmem:[#allocation6 + $0x2fc] sm:$0xf]
    %v261 = vld [vmem:[#allocation12] ss:$8 sm:$0x7]
    %v263 = vlaneseq
    %v264 = vshrl.u32 %v263, 7
    %v265 = vsub.s32 0, %v264
    %v266 = vrot.slane %v261, %v265
    %v267 = vlaneseq
    %v268 = vshrl.u32 %v267, 7
    %v269 = vsub.s32 1, %v268
    %v270 = vrot.slane %v261, %v269
    %v271 = vlaneseq
    %v272 = vshrl.u32 %v271, 7
    %v273 = vsub.s32 2, %v272
    %v274 = vrot.slane %v261, %v273
    %v280 = vunpack.c.l.b16 %v131
    %v281 = vunpack.c.h.b16 %v131
    %v282 = vunpack.c.l.b16 %v132
    %v283 = vunpack.c.h.b16 %v132
    %v284 = vpack.c.b16 %v280, %v280
    %v285 = vpack.c.b16 %v281, %v281
    %v286 = vpack.c.b16 %v282, %v282
    %v287 = vpack.c.b16 %v283, %v283
    %v420 = vunpack.c.l.b16 %v133
    %v421 = vunpack.c.h.b16 %v133
    %v422 = vunpack.c.l.b16 %v134
    %v423 = vunpack.c.l.b16 %v135
    %v424 = vunpack.c.h.b16 %v135
    %v425 = vunpack.c.l.b16 %v136
    %v426 = vunpack.c.l.b16 %v137
    %v427 = vunpack.c.h.b16 %v137
    %v428 = vunpack.c.l.b16 %v138
    %v429 = vunpack.c.l.b16 %v139
    %v430 = vunpack.c.h.b16 %v139
    %v431 = vunpack.c.l.b16 %v140
    %v432 = vunpack.c.l.b16 %v141
    %v433 = vunpack.c.h.b16 %v141
    %v434 = vunpack.c.l.b16 %v142
    %v435 = vunpack.c.l.b16 %v143
    %v436 = vunpack.c.h.b16 %v143
    %v437 = vunpack.c.l.b16 %v144
    %v438 = vunpack.c.l.b16 %v145
    %v439 = vunpack.c.h.b16 %v145
    %v440 = vunpack.c.l.b16 %v146
    %v441 = vunpack.c.l.b16 %v147
    %v442 = vunpack.c.h.b16 %v147
    %v443 = vunpack.c.l.b16 %v148
    %v444 = vunpack.c.l.b16 %v149
    %v445 = vunpack.c.h.b16 %v149
    %v446 = vunpack.c.l.b16 %v150
    %v447 = vunpack.c.l.b16 %v151
    %v448 = vunpack.c.h.b16 %v151
    %v449 = vunpack.c.l.b16 %v152
    %v450 = vunpack.c.l.b16 %v153
    %v451 = vunpack.c.h.b16 %v153
    %v452 = vunpack.c.l.b16 %v154
    %v453 = vunpack.c.l.b16 %v155
    %v454 = vunpack.c.h.b16 %v155
    %v455 = vunpack.c.l.b16 %v156
    %v456 = vunpack.c.l.b16 %v157
    %v457 = vunpack.c.h.b16 %v157
    %v458 = vunpack.c.l.b16 %v158
    %v459 = vunpack.c.l.b16 %v159
    %v460 = vunpack.c.h.b16 %v159
    %v461 = vunpack.c.l.b16 %v160
    %v462 = vunpack.c.l.b16 %v161
    %v463 = vunpack.c.h.b16 %v161
    %v464 = vunpack.c.l.b16 %v162
    %v465 = vunpack.c.l.b16 %v163
    %v466 = vunpack.c.h.b16 %v163
    %v467 = vunpack.c.l.b16 %v164
    %v468 = vunpack.c.l.b16 %v165
    %v469 = vunpack.c.h.b16 %v165
    %v470 = vunpack.c.l.b16 %v166
    %v471 = vunpack.c.l.b16 %v167
    %v472 = vunpack.c.h.b16 %v167
    %v473 = vunpack.c.l.b16 %v168
    %v474 = vunpack.c.l.b16 %v169
    %v475 = vunpack.c.h.b16 %v169
    %v476 = vunpack.c.l.b16 %v170
    %v477 = vunpack.c.l.b16 %v171
    %v478 = vunpack.c.h.b16 %v171
    %v479 = vunpack.c.l.b16 %v172
    %v480 = vunpack.c.l.b16 %v173
    %v481 = vunpack.c.h.b16 %v173
    %v482 = vunpack.c.l.b16 %v174
    %v483 = vunpack.c.l.b16 %v175
    %v484 = vunpack.c.h.b16 %v175
    %v485 = vunpack.c.l.b16 %v176
    %v486 = vunpack.c.l.b16 %v177
    %v487 = vunpack.c.h.b16 %v177
    %v488 = vunpack.c.l.b16 %v178
    %v489 = vunpack.c.l.b16 %v179
    %v490 = vunpack.c.h.b16 %v179
    %v491 = vunpack.c.l.b16 %v180
    %v492 = vunpack.c.l.b16 %v181
    %v493 = vunpack.c.h.b16 %v181
    %v494 = vunpack.c.l.b16 %v182
    %v495 = vunpack.c.l.b16 %v183
    %v496 = vunpack.c.h.b16 %v183
    %v497 = vunpack.c.l.b16 %v184
    %v498 = vunpack.c.l.b16 %v185
    %v499 = vunpack.c.h.b16 %v185
    %v500 = vunpack.c.l.b16 %v186
    %v501 = vunpack.c.l.b16 %v187
    %v502 = vunpack.c.h.b16 %v187
    %v503 = vunpack.c.l.b16 %v188
    %v504 = vunpack.c.l.b16 %v189
    %v505 = vunpack.c.h.b16 %v189
    %v506 = vunpack.c.l.b16 %v190
    %v507 = vunpack.c.l.b16 %v191
    %v508 = vunpack.c.h.b16 %v191
    %v509 = vunpack.c.l.b16 %v192
    %v510 = vunpack.c.l.b16 %v193
    %v511 = vunpack.c.h.b16 %v193
    %v512 = vunpack.c.l.b16 %v194
    %v513 = vunpack.c.l.b16 %v195
    %v514 = vunpack.c.h.b16 %v195
    %v515 = vunpack.c.l.b16 %v196
    %v516 = vunpack.c.l.b16 %v197
    %v517 = vunpack.c.h.b16 %v197
    %v518 = vunpack.c.l.b16 %v198
    %v519 = vunpack.c.l.b16 %v199
    %v520 = vunpack.c.h.b16 %v199
    %v521 = vunpack.c.l.b16 %v200
    %v522 = vunpack.c.l.b16 %v201
    %v523 = vunpack.c.h.b16 %v201
    %v524 = vunpack.c.l.b16 %v202
    %v525 = vunpack.c.l.b16 %v203
    %v526 = vunpack.c.h.b16 %v203
    %v527 = vunpack.c.l.b16 %v204
    %v528 = vunpack.c.l.b16 %v205
    %v529 = vunpack.c.h.b16 %v205
    %v530 = vunpack.c.l.b16 %v206
    %v531 = vunpack.c.l.b16 %v207
    %v532 = vunpack.c.h.b16 %v207
    %v533 = vunpack.c.l.b16 %v208
    %v534 = vunpack.c.l.b16 %v209
    %v535 = vunpack.c.h.b16 %v209
    %v536 = vunpack.c.l.b16 %v210
    %v537 = vunpack.c.l.b16 %v211
    %v538 = vunpack.c.h.b16 %v211
    %v539 = vunpack.c.l.b16 %v212
    %v540 = vunpack.c.l.b16 %v213
    %v541 = vunpack.c.h.b16 %v213
    %v542 = vunpack.c.l.b16 %v214
    %v543 = vunpack.c.l.b16 %v215
    %v544 = vunpack.c.h.b16 %v215
    %v545 = vunpack.c.l.b16 %v216
    %v546 = vunpack.c.l.b16 %v217
    %v547 = vunpack.c.h.b16 %v217
    %v548 = vunpack.c.l.b16 %v218
    %v549 = vunpack.c.l.b16 %v219
    %v550 = vunpack.c.h.b16 %v219
    %v551 = vunpack.c.l.b16 %v220
    %v552 = vunpack.c.l.b16 %v221
    %v553 = vunpack.c.h.b16 %v221
    %v554 = vunpack.c.l.b16 %v222
    %v555 = vunpack.c.l.b16 %v223
    %v556 = vunpack.c.h.b16 %v223
    %v557 = vunpack.c.l.b16 %v224
    %v558 = vunpack.c.l.b16 %v225
    %v559 = vunpack.c.h.b16 %v225
    %v560 = vunpack.c.l.b16 %v226
    %v561 = vunpack.c.l.b16 %v227
    %v562 = vunpack.c.h.b16 %v227
    %v563 = vunpack.c.l.b16 %v228
    %v564 = vunpack.c.l.b16 %v229
    %v565 = vunpack.c.h.b16 %v229
    %v566 = vunpack.c.l.b16 %v230
    %v567 = vunpack.c.l.b16 %v231
    %v568 = vunpack.c.h.b16 %v231
    %v569 = vunpack.c.l.b16 %v232
    %v570 = vunpack.c.l.b16 %v233
    %v571 = vunpack.c.h.b16 %v233
    %v572 = vunpack.c.l.b16 %v234
    %v573 = vunpack.c.l.b16 %v235
    %v574 = vunpack.c.h.b16 %v235
    %v575 = vunpack.c.l.b16 %v236
    %v576 = vunpack.c.l.b16 %v237
    %v577 = vunpack.c.h.b16 %v237
    %v578 = vunpack.c.l.b16 %v238
    %v579 = vunpack.c.l.b16 %v239
    %v580 = vunpack.c.h.b16 %v239
    %v581 = vunpack.c.l.b16 %v240
    %v582 = vunpack.c.l.b16 %v241
    %v583 = vunpack.c.h.b16 %v241
    %v584 = vunpack.c.l.b16 %v242
    %v585 = vunpack.c.l.b16 %v243
    %v586 = vunpack.c.h.b16 %v243
    %v587 = vunpack.c.l.b16 %v244
    %v588 = vunpack.c.l.b16 %v245
    %v589 = vunpack.c.h.b16 %v245
    %v590 = vunpack.c.l.b16 %v246
    %v591 = vunpack.c.l.b16 %v247
    %v592 = vunpack.c.h.b16 %v247
    %v593 = vunpack.c.l.b16 %v248
    %v594 = vunpack.c.l.b16 %v249
    %v595 = vunpack.c.h.b16 %v249
    %v596 = vunpack.c.l.b16 %v250
    %v597 = vunpack.c.l.b16 %v251
    %v598 = vunpack.c.h.b16 %v251
    %v599 = vunpack.c.l.b16 %v252
    %v600 = vunpack.c.l.b16 %v253
    %v601 = vunpack.c.h.b16 %v253
    %v602 = vunpack.c.l.b16 %v254
    %v603 = vunpack.c.l.b16 %v255
    %v604 = vunpack.c.h.b16 %v255
    %v605 = vunpack.c.l.b16 %v256
    %v606 = vunpack.c.l.b16 %v257
    %v607 = vunpack.c.h.b16 %v257
    %v608 = vunpack.c.l.b16 %v258
    %v609 = vunpack.c.l.b16 %v259
    %v610 = vunpack.c.h.b16 %v259
    %v611 = vunpack.c.l.b16 %v260
    %v612 = vpack.c.b16 %v423, %v420
    %v613 = vpack.c.b16 %v424, %v421
    %v614 = vpack.c.b16 %v425, %v422
    %v615 = vpack.c.b16 %v429, %v426
    %v616 = vpack.c.b16 %v430, %v427
    %v617 = vpack.c.b16 %v431, %v428
    %v618 = vpack.c.b16 %v435, %v432
    %v619 = vpack.c.b16 %v436, %v433
    %v620 = vpack.c.b16 %v437, %v434
    %v621 = vpack.c.b16 %v441, %v438
    %v622 = vpack.c.b16 %v442, %v439
    %v623 = vpack.c.b16 %v443, %v440
    %v624 = vpack.c.b16 %v447, %v444
    %v625 = vpack.c.b16 %v448, %v445
    %v626 = vpack.c.b16 %v449, %v446
    %v627 = vpack.c.b16 %v453, %v450
    %v628 = vpack.c.b16 %v454, %v451
    %v629 = vpack.c.b16 %v455, %v452
    %v630 = vpack.c.b16 %v459, %v456
    %v631 = vpack.c.b16 %v460, %v457
    %v632 = vpack.c.b16 %v461, %v458
    %v633 = vpack.c.b16 %v465, %v462
    %v634 = vpack.c.b16 %v466, %v463
    %v635 = vpack.c.b16 %v467, %v464
    %v636 = vpack.c.b16 %v471, %v468
    %v637 = vpack.c.b16 %v472, %v469
    %v638 = vpack.c.b16 %v473, %v470
    %v639 = vpack.c.b16 %v477, %v474
    %v640 = vpack.c.b16 %v478, %v475
    %v641 = vpack.c.b16 %v479, %v476
    %v642 = vpack.c.b16 %v483, %v480
    %v643 = vpack.c.b16 %v484, %v481
    %v644 = vpack.c.b16 %v485, %v482
    %v645 = vpack.c.b16 %v489, %v486
    %v646 = vpack.c.b16 %v490, %v487
    %v647 = vpack.c.b16 %v491, %v488
    %v648 = vpack.c.b16 %v495, %v492
    %v649 = vpack.c.b16 %v496, %v493
    %v650 = vpack.c.b16 %v497, %v494
    %v651 = vpack.c.b16 %v501, %v498
    %v652 = vpack.c.b16 %v502, %v499
    %v653 = vpack.c.b16 %v503, %v500
    %v654 = vpack.c.b16 %v507, %v504
    %v655 = vpack.c.b16 %v508, %v505
    %v656 = vpack.c.b16 %v509, %v506
    %v657 = vpack.c.b16 %v513, %v510
    %v658 = vpack.c.b16 %v514, %v511
    %v659 = vpack.c.b16 %v515, %v512
    %v660 = vpack.c.b16 %v519, %v516
    %v661 = vpack.c.b16 %v520, %v517
    %v662 = vpack.c.b16 %v521, %v518
    %v663 = vpack.c.b16 %v525, %v522
    %v664 = vpack.c.b16 %v526, %v523
    %v665 = vpack.c.b16 %v527, %v524
    %v666 = vpack.c.b16 %v531, %v528
    %v667 = vpack.c.b16 %v532, %v529
    %v668 = vpack.c.b16 %v533, %v530
    %v669 = vpack.c.b16 %v537, %v534
    %v670 = vpack.c.b16 %v538, %v535
    %v671 = vpack.c.b16 %v539, %v536
    %v672 = vpack.c.b16 %v543, %v540
    %v673 = vpack.c.b16 %v544, %v541
    %v674 = vpack.c.b16 %v545, %v542
    %v675 = vpack.c.b16 %v549, %v546
    %v676 = vpack.c.b16 %v550, %v547
    %v677 = vpack.c.b16 %v551, %v548
    %v678 = vpack.c.b16 %v555, %v552
    %v679 = vpack.c.b16 %v556, %v553
    %v680 = vpack.c.b16 %v557, %v554
    %v681 = vpack.c.b16 %v561, %v558
    %v682 = vpack.c.b16 %v562, %v559
    %v683 = vpack.c.b16 %v563, %v560
    %v684 = vpack.c.b16 %v567, %v564
    %v685 = vpack.c.b16 %v568, %v565
    %v686 = vpack.c.b16 %v569, %v566
    %v687 = vpack.c.b16 %v573, %v570
    %v688 = vpack.c.b16 %v574, %v571
    %v689 = vpack.c.b16 %v575, %v572
    %v690 = vpack.c.b16 %v579, %v576
    %v691 = vpack.c.b16 %v580, %v577
    %v692 = vpack.c.b16 %v581, %v578
    %v693 = vpack.c.b16 %v585, %v582
    %v694 = vpack.c.b16 %v586, %v583
    %v695 = vpack.c.b16 %v587, %v584
    %v696 = vpack.c.b16 %v591, %v588
    %v697 = vpack.c.b16 %v592, %v589
    %v698 = vpack.c.b16 %v593, %v590
    %v699 = vpack.c.b16 %v597, %v594
    %v700 = vpack.c.b16 %v598, %v595
    %v701 = vpack.c.b16 %v599, %v596
    %v702 = vpack.c.b16 %v603, %v600
    %v703 = vpack.c.b16 %v604, %v601
    %v704 = vpack.c.b16 %v605, %v602
    %v705 = vpack.c.b16 %v609, %v606
    %v706 = vpack.c.b16 %v610, %v607
    %v707 = vpack.c.b16 %v611, %v608
    %804 = vmatprep.subr.bf16.mxu0 %v634
    %805 = vmatpush1.bf16.msra.mxu0 %v633
    %806 = vmatprep.subr.bf16.mxu0 %v631
    %807 = vmatpush1.bf16.msra.mxu0 %v630
    %808 = vmatprep.subr.bf16.mxu0 %v628
    %809 = vmatpush1.bf16.msra.mxu0 %v627
    %810 = vmatprep.subr.bf16.mxu0 %v625
    %811 = vmatpush1.bf16.msra.mxu0 %v624
    %812 = vmatprep.subr.bf16.mxu0 %v622
    %813 = vmatpush1.bf16.msra.mxu0 %v621
    %814 = vmatprep.subr.bf16.mxu0 %v619
    %815 = vmatpush1.bf16.msra.mxu0 %v618
    %816 = vmatprep.subr.bf16.mxu0 %v616
    %817 = vmatpush1.bf16.msra.mxu0 %v615
    %818 = vmatprep.subr.bf16.mxu0 %v613
    %819 = vmatpush1.bf16.msra.mxu0 %v612
    %820 = vmatprep.subr.bf16.mxu0 %v658
    %821 = vmatpush2.bf16.msra.mxu0 %v657
    %822 = vmatprep.subr.bf16.mxu0 %v655
    %823 = vmatpush2.bf16.msra.mxu0 %v654
    %824 = vmatprep.subr.bf16.mxu0 %v652
    %825 = vmatpush2.bf16.msra.mxu0 %v651
    %826 = vmatprep.subr.bf16.mxu0 %v649
    %827 = vmatpush2.bf16.msra.mxu0 %v648
    %828 = vmatprep.subr.bf16.mxu0 %v646
    %829 = vmatpush2.bf16.msra.mxu0 %v645
    %830 = vmatprep.subr.bf16.mxu0 %v643
    %831 = vmatpush2.bf16.msra.mxu0 %v642
    %832 = vmatprep.subr.bf16.mxu0 %v640
    %833 = vmatpush2.bf16.msra.mxu0 %v639
    %834 = vmatprep.subr.bf16.mxu0 %v637
    %835 = vmatpush2.bf16.msra.mxu0 %v636
    %836 = vmatprep.mubr.bf16.mxu0 %v285
    %837 = vmatmul.mubr.bf16.gmra.mxu0 %v284
    %v838 = vpop.f32.mrf.mxu0
    %v839 = vadd.f32 %v266, %v838
    %v840 = vpop.f32.mrf.mxu0
    %v841 = vadd.f32 %v270, %v840
    %v842 = vpop.f32.mrf.mxu0
    %v843 = vpop.f32.mrf.mxu0
    %844 = vdwg.mxu0
    %845 = vmatprep.subr.bf16.mxu0 %v682
    %846 = vmatpush1.bf16.msra.mxu0 %v681
    %847 = vmatprep.subr.bf16.mxu0 %v679
    %848 = vmatpush1.bf16.msra.mxu0 %v678
    %849 = vmatprep.subr.bf16.mxu0 %v676
    %850 = vmatpush1.bf16.msra.mxu0 %v675
    %851 = vmatprep.subr.bf16.mxu0 %v673
    %852 = vmatpush1.bf16.msra.mxu0 %v672
    %853 = vmatprep.subr.bf16.mxu0 %v670
    %854 = vmatpush1.bf16.msra.mxu0 %v669
    %855 = vmatprep.subr.bf16.mxu0 %v667
    %856 = vmatpush1.bf16.msra.mxu0 %v666
    %857 = vmatprep.subr.bf16.mxu0 %v664
    %858 = vmatpush1.bf16.msra.mxu0 %v663
    %859 = vmatprep.subr.bf16.mxu0 %v661
    %860 = vmatpush1.bf16.msra.mxu0 %v660
    %861 = vmatprep.subr.bf16.mxu0 %v706
    %862 = vmatpush2.bf16.msra.mxu0 %v705
    %863 = vmatprep.subr.bf16.mxu0 %v703
    %864 = vmatpush2.bf16.msra.mxu0 %v702
    %865 = vmatprep.subr.bf16.mxu0 %v700
    %866 = vmatpush2.bf16.msra.mxu0 %v699
    %867 = vmatprep.subr.bf16.mxu0 %v697
    %868 = vmatpush2.bf16.msra.mxu0 %v696
    %869 = vmatprep.subr.bf16.mxu0 %v694
    %870 = vmatpush2.bf16.msra.mxu0 %v693
    %871 = vmatprep.subr.bf16.mxu0 %v691
    %872 = vmatpush2.bf16.msra.mxu0 %v690
    %873 = vmatprep.subr.bf16.mxu0 %v688
    %874 = vmatpush2.bf16.msra.mxu0 %v687
    %875 = vmatprep.subr.bf16.mxu0 %v685
    %876 = vmatpush2.bf16.msra.mxu0 %v684
    %877 = vmatprep.mubr.bf16.mxu0 %v287
    %878 = vmatmul.mubr.bf16.gmra.mxu0 %v286
    %v879 = vpop.f32.mrf.mxu0
    %v880 = vadd.f32 %v839, %v879
    %v881 = vpop.f32.mrf.mxu0
    %v882 = vadd.f32 %v841, %v881
    %v883 = vpop.f32.mrf.mxu0
    %v884 = vpop.f32.mrf.mxu0
    %885 = vdwg.mxu0
    %886 = vmatprep.subr.bf16.mxu0 0
    %887 = vmatpush1.bf16.msra.mxu0 %v635
    %888 = vmatprep.subr.bf16.mxu0 0
    %889 = vmatpush1.bf16.msra.mxu0 %v632
    %890 = vmatprep.subr.bf16.mxu0 0
    %891 = vmatpush1.bf16.msra.mxu0 %v629
    %892 = vmatprep.subr.bf16.mxu0 0
    %893 = vmatpush1.bf16.msra.mxu0 %v626
    %894 = vmatprep.subr.bf16.mxu0 0
    %895 = vmatpush1.bf16.msra.mxu0 %v623
    %896 = vmatprep.subr.bf16.mxu0 0
    %897 = vmatpush1.bf16.msra.mxu0 %v620
    %898 = vmatprep.subr.bf16.mxu0 0
    %899 = vmatpush1.bf16.msra.mxu0 %v617
    %900 = vmatprep.subr.bf16.mxu0 0
    %901 = vmatpush1.bf16.msra.mxu0 %v614
    %902 = vmatprep.subr.bf16.mxu0 0
    %903 = vmatpush2.bf16.msra.mxu0 %v659
    %904 = vmatprep.subr.bf16.mxu0 0
    %905 = vmatpush2.bf16.msra.mxu0 %v656
    %906 = vmatprep.subr.bf16.mxu0 0
    %907 = vmatpush2.bf16.msra.mxu0 %v653
    %908 = vmatprep.subr.bf16.mxu0 0
    %909 = vmatpush2.bf16.msra.mxu0 %v650
    %910 = vmatprep.subr.bf16.mxu0 0
    %911 = vmatpush2.bf16.msra.mxu0 %v647
    %912 = vmatprep.subr.bf16.mxu0 0
    %913 = vmatpush2.bf16.msra.mxu0 %v644
    %914 = vmatprep.subr.bf16.mxu0 0
    %915 = vmatpush2.bf16.msra.mxu0 %v641
    %916 = vmatprep.subr.bf16.mxu0 0
    %917 = vmatpush2.bf16.msra.mxu0 %v638
    %918 = vmatprep.mubr.bf16.mxu0 %v285
    %919 = vmatmul.mubr.bf16.gmra.mxu0 %v284
    %v920 = vpop.f32.mrf.mxu0
    %v921 = vadd.f32 %v274, %v920
    %v922 = vpop.f32.mrf.mxu0
    %v923 = vpop.f32.mrf.mxu0
    %v924 = vpop.f32.mrf.mxu0
    %925 = vdwg.mxu0
    %926 = vmatprep.subr.bf16.mxu0 0
    %927 = vmatpush1.bf16.msra.mxu0 %v683
    %928 = vmatprep.subr.bf16.mxu0 0
    %929 = vmatpush1.bf16.msra.mxu0 %v680
    %930 = vmatprep.subr.bf16.mxu0 0
    %931 = vmatpush1.bf16.msra.mxu0 %v677
    %932 = vmatprep.subr.bf16.mxu0 0
    %933 = vmatpush1.bf16.msra.mxu0 %v674
    %934 = vmatprep.subr.bf16.mxu0 0
    %935 = vmatpush1.bf16.msra.mxu0 %v671
    %936 = vmatprep.subr.bf16.mxu0 0
    %937 = vmatpush1.bf16.msra.mxu0 %v668
    %938 = vmatprep.subr.bf16.mxu0 0
    %939 = vmatpush1.bf16.msra.mxu0 %v665
    %940 = vmatprep.subr.bf16.mxu0 0
    %941 = vmatpush1.bf16.msra.mxu0 %v662
    %942 = vmatprep.subr.bf16.mxu0 0
    %943 = vmatpush2.bf16.msra.mxu0 %v707
    %944 = vmatprep.subr.bf16.mxu0 0
    %945 = vmatpush2.bf16.msra.mxu0 %v704
    %946 = vmatprep.subr.bf16.mxu0 0
    %947 = vmatpush2.bf16.msra.mxu0 %v701
    %948 = vmatprep.subr.bf16.mxu0 0
    %949 = vmatpush2.bf16.msra.mxu0 %v698
    %950 = vmatprep.subr.bf16.mxu0 0
    %951 = vmatpush2.bf16.msra.mxu0 %v695
    %952 = vmatprep.subr.bf16.mxu0 0
    %953 = vmatpush2.bf16.msra.mxu0 %v692
    %954 = vmatprep.subr.bf16.mxu0 0
    %955 = vmatpush2.bf16.msra.mxu0 %v689
    %956 = vmatprep.subr.bf16.mxu0 0
    %957 = vmatpush2.bf16.msra.mxu0 %v686
    %958 = vmatprep.mubr.bf16.mxu0 %v287
    %959 = vmatmul.mubr.bf16.gmra.mxu0 %v286
    %v960 = vpop.f32.mrf.mxu0
    %v961 = vadd.f32 %v921, %v960
    %v962 = vpop.f32.mrf.mxu0
    %v963 = vpop.f32.mrf.mxu0
    %v964 = vpop.f32.mrf.mxu0
    %965 = vdwg.mxu0
    %v966 = vmax.f32 %v880, 0.0
    %v967 = vmax.f32 %v882, 0.0
    %v968 = vmax.f32 %v961, 0.0
    %v969 = vpack.c.bf16 %v966, %v966
    %v970 = vpack.c.bf16 %v967, %v967
    %v971 = vpack.c.bf16 %v968, %v968
    %v972 = vld [vmem:[#allocation8] sm:$0xff]
    %v973 = vld [vmem:[#allocation8 + $0x8] sm:$0xf]
    %v974 = vld [vmem:[#allocation8 + $0x14] sm:$0xff]
    %v975 = vld [vmem:[#allocation8 + $0x1c] sm:$0xf]
    %v976 = vld [vmem:[#allocation8 + $0x28] sm:$0xff]
    %v977 = vld [vmem:[#allocation8 + $0x30] sm:$0xf]
    %v978 = vld [vmem:[#allocation8 + $0x3c] sm:$0xff]
    %v979 = vld [vmem:[#allocation8 + $0x44] sm:$0xf]
    %v980 = vld [vmem:[#allocation8 + $0x50] sm:$0xff]
    %v981 = vld [vmem:[#allocation8 + $0x58] sm:$0xf]
    %v982 = vld [vmem:[#allocation8 + $0x64] sm:$0xff]
    %v983 = vld [vmem:[#allocation8 + $0x6c] sm:$0xf]
    %v984 = vld [vmem:[#allocation8 + $0x78] sm:$0xff]
    %v985 = vld [vmem:[#allocation8 + $0x80] sm:$0xf]
    %v986 = vld [vmem:[#allocation8 + $0x8c] sm:$0xff]
    %v987 = vld [vmem:[#allocation8 + $0x94] sm:$0xf]
    %v988 = vld [vmem:[#allocation8 + $0xa0] sm:$0xff]
    %v989 = vld [vmem:[#allocation8 + $0xa8] sm:$0xf]
    %v990 = vld [vmem:[#allocation8 + $0xb4] sm:$0xff]
    %v991 = vld [vmem:[#allocation8 + $0xbc] sm:$0xf]
    %v992 = vld [vmem:[#allocation8 + $0xc8] sm:$0xff]
    %v993 = vld [vmem:[#allocation8 + $0xd0] sm:$0xf]
    %v994 = vld [vmem:[#allocation8 + $0xdc] sm:$0xff]
    %v995 = vld [vmem:[#allocation8 + $0xe4] sm:$0xf]
    %v996 = vld [vmem:[#allocation8 + $0xf0] sm:$0xff]
    %v997 = vld [vmem:[#allocation8 + $0xf8] sm:$0xf]
    %v998 = vld [vmem:[#allocation8 + $0x104] sm:$0xff]
    %v999 = vld [vmem:[#allocation8 + $0x10c] sm:$0xf]
    %v1000 = vld [vmem:[#allocation8 + $0x118] sm:$0xff]
    %v1001 = vld [vmem:[#allocation8 + $0x120] sm:$0xf]
    %v1002 = vld [vmem:[#allocation8 + $0x12c] sm:$0xff]
    %v1003 = vld [vmem:[#allocation8 + $0x134] sm:$0xf]
    %v1004 = vld [vmem:[#allocation8 + $0x140] sm:$0xff]
    %v1005 = vld [vmem:[#allocation8 + $0x148] sm:$0xf]
    %v1006 = vld [vmem:[#allocation8 + $0x154] sm:$0xff]
    %v1007 = vld [vmem:[#allocation8 + $0x15c] sm:$0xf]
    %v1008 = vld [vmem:[#allocation8 + $0x168] sm:$0xff]
    %v1009 = vld [vmem:[#allocation8 + $0x170] sm:$0xf]
    %v1010 = vld [vmem:[#allocation8 + $0x17c] sm:$0xff]
    %v1011 = vld [vmem:[#allocation8 + $0x184] sm:$0xf]
    %v1012 = vld [vmem:[#allocation8 + $0x190] sm:$0xff]
    %v1013 = vld [vmem:[#allocation8 + $0x198] sm:$0xf]
    %v1014 = vld [vmem:[#allocation8 + $0x1a4] sm:$0xff]
    %v1015 = vld [vmem:[#allocation8 + $0x1ac] sm:$0xf]
    %v1016 = vld [vmem:[#allocation8 + $0x1b8] sm:$0xff]
    %v1017 = vld [vmem:[#allocation8 + $0x1c0] sm:$0xf]
    %v1018 = vld [vmem:[#allocation8 + $0x1cc] sm:$0xff]
    %v1019 = vld [vmem:[#allocation8 + $0x1d4] sm:$0xf]
    %v1020 = vld [vmem:[#allocation8 + $0x1e0] sm:$0xff]
    %v1021 = vld [vmem:[#allocation8 + $0x1e8] sm:$0xf]
    %v1022 = vld [vmem:[#allocation8 + $0x1f4] sm:$0xff]
    %v1023 = vld [vmem:[#allocation8 + $0x1fc] sm:$0xf]
    %v1024 = vld [vmem:[#allocation8 + $0x208] sm:$0xff]
    %v1025 = vld [vmem:[#allocation8 + $0x210] sm:$0xf]
    %v1026 = vld [vmem:[#allocation8 + $0x21c] sm:$0xff]
    %v1027 = vld [vmem:[#allocation8 + $0x224] sm:$0xf]
    %v1028 = vld [vmem:[#allocation8 + $0x230] sm:$0xff]
    %v1029 = vld [vmem:[#allocation8 + $0x238] sm:$0xf]
    %v1030 = vld [vmem:[#allocation8 + $0x244] sm:$0xff]
    %v1031 = vld [vmem:[#allocation8 + $0x24c] sm:$0xf]
    %v1032 = vld [vmem:[#allocation8 + $0x258] sm:$0xff]
    %v1033 = vld [vmem:[#allocation8 + $0x260] sm:$0xf]
    %v1034 = vld [vmem:[#allocation8 + $0x26c] sm:$0xff]
    %v1035 = vld [vmem:[#allocation8 + $0x274] sm:$0xf]
    %v1036 = vld [vmem:[#allocation8 + $0x280] sm:$0xff]
    %v1037 = vld [vmem:[#allocation8 + $0x288] sm:$0xf]
    %v1038 = vld [vmem:[#allocation8 + $0x294] sm:$0xff]
    %v1039 = vld [vmem:[#allocation8 + $0x29c] sm:$0xf]
    %v1040 = vld [vmem:[#allocation8 + $0x2a8] sm:$0xff]
    %v1041 = vld [vmem:[#allocation8 + $0x2b0] sm:$0xf]
    %v1042 = vld [vmem:[#allocation8 + $0x2bc] sm:$0xff]
    %v1043 = vld [vmem:[#allocation8 + $0x2c4] sm:$0xf]
    %v1044 = vld [vmem:[#allocation8 + $0x2d0] sm:$0xff]
    %v1045 = vld [vmem:[#allocation8 + $0x2d8] sm:$0xf]
    %v1046 = vld [vmem:[#allocation8 + $0x2e4] sm:$0xff]
    %v1047 = vld [vmem:[#allocation8 + $0x2ec] sm:$0xf]
    %v1048 = vld [vmem:[#allocation8 + $0x2f8] sm:$0xff]
    %v1049 = vld [vmem:[#allocation8 + $0x300] sm:$0xf]
    %v1050 = vld [vmem:[#allocation8 + $0x30c] sm:$0xff]
    %v1051 = vld [vmem:[#allocation8 + $0x314] sm:$0xf]
    %v1052 = vld [vmem:[#allocation8 + $0x320] sm:$0xff]
    %v1053 = vld [vmem:[#allocation8 + $0x328] sm:$0xf]
    %v1054 = vld [vmem:[#allocation8 + $0x334] sm:$0xff]
    %v1055 = vld [vmem:[#allocation8 + $0x33c] sm:$0xf]
    %v1056 = vld [vmem:[#allocation8 + $0x348] sm:$0xff]
    %v1057 = vld [vmem:[#allocation8 + $0x350] sm:$0xf]
    %v1058 = vld [vmem:[#allocation8 + $0x35c] sm:$0xff]
    %v1059 = vld [vmem:[#allocation8 + $0x364] sm:$0xf]
    %v1060 = vld [vmem:[#allocation8 + $0x370] sm:$0xff]
    %v1061 = vld [vmem:[#allocation8 + $0x378] sm:$0xf]
    %v1062 = vld [vmem:[#allocation8 + $0x384] sm:$0xff]
    %v1063 = vld [vmem:[#allocation8 + $0x38c] sm:$0xf]
    %v1064 = vld [vmem:[#allocation8 + $0x398] sm:$0xff]
    %v1065 = vld [vmem:[#allocation8 + $0x3a0] sm:$0xf]
    %v1066 = vld [vmem:[#allocation8 + $0x3ac] sm:$0xff]
    %v1067 = vld [vmem:[#allocation8 + $0x3b4] sm:$0xf]
    %s1068 = scalar_lea.vmem [#allocation12], 1
    %v1069 = vld [vmem:[%s1068] ss:$8 sm:$0x7]
    %v1071 = vlaneseq
    %v1072 = vshrl.u32 %v1071, 7
    %v1073 = vsub.s32 0, %v1072
    %v1074 = vrot.slane %v1069, %v1073
    %v1075 = vlaneseq
    %v1076 = vshrl.u32 %v1075, 7
    %v1077 = vsub.s32 1, %v1076
    %v1078 = vrot.slane %v1069, %v1077
    %v1079 = vlaneseq
    %v1080 = vshrl.u32 %v1079, 7
    %v1081 = vsub.s32 2, %v1080
    %v1082 = vrot.slane %v1069, %v1081
    %v1182 = vunpack.c.l.b16 %v972
    %v1183 = vunpack.c.h.b16 %v972
    %v1184 = vunpack.c.l.b16 %v973
    %v1185 = vunpack.c.l.b16 %v974
    %v1186 = vunpack.c.h.b16 %v974
    %v1187 = vunpack.c.l.b16 %v975
    %v1188 = vunpack.c.l.b16 %v976
    %v1189 = vunpack.c.h.b16 %v976
    %v1190 = vunpack.c.l.b16 %v977
    %v1191 = vunpack.c.l.b16 %v978
    %v1192 = vunpack.c.h.b16 %v978
    %v1193 = vunpack.c.l.b16 %v979
    %v1194 = vunpack.c.l.b16 %v980
    %v1195 = vunpack.c.h.b16 %v980
    %v1196 = vunpack.c.l.b16 %v981
    %v1197 = vunpack.c.l.b16 %v982
    %v1198 = vunpack.c.h.b16 %v982
    %v1199 = vunpack.c.l.b16 %v983
    %v1200 = vunpack.c.l.b16 %v984
    %v1201 = vunpack.c.h.b16 %v984
    %v1202 = vunpack.c.l.b16 %v985
    %v1203 = vunpack.c.l.b16 %v986
    %v1204 = vunpack.c.h.b16 %v986
    %v1205 = vunpack.c.l.b16 %v987
    %v1206 = vunpack.c.l.b16 %v988
    %v1207 = vunpack.c.h.b16 %v988
    %v1208 = vunpack.c.l.b16 %v989
    %v1209 = vunpack.c.l.b16 %v990
    %v1210 = vunpack.c.h.b16 %v990
    %v1211 = vunpack.c.l.b16 %v991
    %v1212 = vunpack.c.l.b16 %v992
    %v1213 = vunpack.c.h.b16 %v992
    %v1214 = vunpack.c.l.b16 %v993
    %v1215 = vunpack.c.l.b16 %v994
    %v1216 = vunpack.c.h.b16 %v994
    %v1217 = vunpack.c.l.b16 %v995
    %v1218 = vunpack.c.l.b16 %v996
    %v1219 = vunpack.c.h.b16 %v996
    %v1220 = vunpack.c.l.b16 %v997
    %v1221 = vunpack.c.l.b16 %v998
    %v1222 = vunpack.c.h.b16 %v998
    %v1223 = vunpack.c.l.b16 %v999
    %v1224 = vunpack.c.l.b16 %v1000
    %v1225 = vunpack.c.h.b16 %v1000
    %v1226 = vunpack.c.l.b16 %v1001
    %v1227 = vunpack.c.l.b16 %v1002
    %v1228 = vunpack.c.h.b16 %v1002
    %v1229 = vunpack.c.l.b16 %v1003
    %v1230 = vunpack.c.l.b16 %v1004
    %v1231 = vunpack.c.h.b16 %v1004
    %v1232 = vunpack.c.l.b16 %v1005
    %v1233 = vunpack.c.l.b16 %v1006
    %v1234 = vunpack.c.h.b16 %v1006
    %v1235 = vunpack.c.l.b16 %v1007
    %v1236 = vunpack.c.l.b16 %v1008
    %v1237 = vunpack.c.h.b16 %v1008
    %v1238 = vunpack.c.l.b16 %v1009
    %v1239 = vunpack.c.l.b16 %v1010
    %v1240 = vunpack.c.h.b16 %v1010
    %v1241 = vunpack.c.l.b16 %v1011
    %v1242 = vunpack.c.l.b16 %v1012
    %v1243 = vunpack.c.h.b16 %v1012
    %v1244 = vunpack.c.l.b16 %v1013
    %v1245 = vunpack.c.l.b16 %v1014
    %v1246 = vunpack.c.h.b16 %v1014
    %v1247 = vunpack.c.l.b16 %v1015
    %v1248 = vunpack.c.l.b16 %v1016
    %v1249 = vunpack.c.h.b16 %v1016
    %v1250 = vunpack.c.l.b16 %v1017
    %v1251 = vunpack.c.l.b16 %v1018
    %v1252 = vunpack.c.h.b16 %v1018
    %v1253 = vunpack.c.l.b16 %v1019
    %v1254 = vunpack.c.l.b16 %v1020
    %v1255 = vunpack.c.h.b16 %v1020
    %v1256 = vunpack.c.l.b16 %v1021
    %v1257 = vunpack.c.l.b16 %v1022
    %v1258 = vunpack.c.h.b16 %v1022
    %v1259 = vunpack.c.l.b16 %v1023
    %v1260 = vunpack.c.l.b16 %v1024
    %v1261 = vunpack.c.h.b16 %v1024
    %v1262 = vunpack.c.l.b16 %v1025
    %v1263 = vunpack.c.l.b16 %v1026
    %v1264 = vunpack.c.h.b16 %v1026
    %v1265 = vunpack.c.l.b16 %v1027
    %v1266 = vunpack.c.l.b16 %v1028
    %v1267 = vunpack.c.h.b16 %v1028
    %v1268 = vunpack.c.l.b16 %v1029
    %v1269 = vunpack.c.l.b16 %v1030
    %v1270 = vunpack.c.h.b16 %v1030
    %v1271 = vunpack.c.l.b16 %v1031
    %v1272 = vunpack.c.l.b16 %v1032
    %v1273 = vunpack.c.h.b16 %v1032
    %v1274 = vunpack.c.l.b16 %v1033
    %v1275 = vunpack.c.l.b16 %v1034
    %v1276 = vunpack.c.h.b16 %v1034
    %v1277 = vunpack.c.l.b16 %v1035
    %v1278 = vunpack.c.l.b16 %v1036
    %v1279 = vunpack.c.h.b16 %v1036
    %v1280 = vunpack.c.l.b16 %v1037
    %v1281 = vunpack.c.l.b16 %v1038
    %v1282 = vunpack.c.h.b16 %v1038
    %v1283 = vunpack.c.l.b16 %v1039
    %v1284 = vunpack.c.l.b16 %v1040
    %v1285 = vunpack.c.h.b16 %v1040
    %v1286 = vunpack.c.l.b16 %v1041
    %v1287 = vunpack.c.l.b16 %v1042
    %v1288 = vunpack.c.h.b16 %v1042
    %v1289 = vunpack.c.l.b16 %v1043
    %v1290 = vunpack.c.l.b16 %v1044
    %v1291 = vunpack.c.h.b16 %v1044
    %v1292 = vunpack.c.l.b16 %v1045
    %v1293 = vunpack.c.l.b16 %v1046
    %v1294 = vunpack.c.h.b16 %v1046
    %v1295 = vunpack.c.l.b16 %v1047
    %v1296 = vunpack.c.l.b16 %v1048
    %v1297 = vunpack.c.h.b16 %v1048
    %v1298 = vunpack.c.l.b16 %v1049
    %v1299 = vunpack.c.l.b16 %v1050
    %v1300 = vunpack.c.h.b16 %v1050
    %v1301 = vunpack.c.l.b16 %v1051
    %v1302 = vunpack.c.l.b16 %v1052
    %v1303 = vunpack.c.h.b16 %v1052
    %v1304 = vunpack.c.l.b16 %v1053
    %v1305 = vunpack.c.l.b16 %v1054
    %v1306 = vunpack.c.h.b16 %v1054
    %v1307 = vunpack.c.l.b16 %v1055
    %v1308 = vunpack.c.l.b16 %v1056
    %v1309 = vunpack.c.h.b16 %v1056
    %v1310 = vunpack.c.l.b16 %v1057
    %v1311 = vunpack.c.l.b16 %v1058
    %v1312 = vunpack.c.h.b16 %v1058
    %v1313 = vunpack.c.l.b16 %v1059
    %v1314 = vunpack.c.l.b16 %v1060
    %v1315 = vunpack.c.h.b16 %v1060
    %v1316 = vunpack.c.l.b16 %v1061
    %v1317 = vunpack.c.l.b16 %v1062
    %v1318 = vunpack.c.h.b16 %v1062
    %v1319 = vunpack.c.l.b16 %v1063
    %v1320 = vunpack.c.l.b16 %v1064
    %v1321 = vunpack.c.h.b16 %v1064
    %v1322 = vunpack.c.l.b16 %v1065
    %v1323 = vunpack.c.l.b16 %v1066
    %v1324 = vunpack.c.h.b16 %v1066
    %v1325 = vunpack.c.l.b16 %v1067
    %v1326 = vpack.c.b16 %v1185, %v1182
    %v1327 = vpack.c.b16 %v1186, %v1183
    %v1328 = vpack.c.b16 %v1187, %v1184
    %v1329 = vpack.c.b16 %v1191, %v1188
    %v1330 = vpack.c.b16 %v1192, %v1189
    %v1331 = vpack.c.b16 %v1193, %v1190
    %v1332 = vpack.c.b16 %v1197, %v1194
    %v1333 = vpack.c.b16 %v1198, %v1195
    %v1334 = vpack.c.b16 %v1199, %v1196
    %v1335 = vpack.c.b16 %v1203, %v1200
    %v1336 = vpack.c.b16 %v1204, %v1201
    %v1337 = vpack.c.b16 %v1205, %v1202
    %v1338 = vpack.c.b16 %v1209, %v1206
    %v1339 = vpack.c.b16 %v1210, %v1207
    %v1340 = vpack.c.b16 %v1211, %v1208
    %v1341 = vpack.c.b16 %v1215, %v1212
    %v1342 = vpack.c.b16 %v1216, %v1213
    %v1343 = vpack.c.b16 %v1217, %v1214
    %v1344 = vpack.c.b16 %v1221, %v1218
    %v1345 = vpack.c.b16 %v1222, %v1219
    %v1346 = vpack.c.b16 %v1223, %v1220
    %v1347 = vpack.c.b16 %v1227, %v1224
    %v1348 = vpack.c.b16 %v1228, %v1225
    %v1349 = vpack.c.b16 %v1229, %v1226
    %v1350 = vpack.c.b16 %v1233, %v1230
    %v1351 = vpack.c.b16 %v1234, %v1231
    %v1352 = vpack.c.b16 %v1235, %v1232
    %v1353 = vpack.c.b16 %v1239, %v1236
    %v1354 = vpack.c.b16 %v1240, %v1237
    %v1355 = vpack.c.b16 %v1241, %v1238
    %v1356 = vpack.c.b16 %v1245, %v1242
    %v1357 = vpack.c.b16 %v1246, %v1243
    %v1358 = vpack.c.b16 %v1247, %v1244
    %v1359 = vpack.c.b16 %v1251, %v1248
    %v1360 = vpack.c.b16 %v1252, %v1249
    %v1361 = vpack.c.b16 %v1253, %v1250
    %v1362 = vpack.c.b16 %v1257, %v1254
    %v1363 = vpack.c.b16 %v1258, %v1255
    %v1364 = vpack.c.b16 %v1259, %v1256
    %v1365 = vpack.c.b16 %v1263, %v1260
    %v1366 = vpack.c.b16 %v1264, %v1261
    %v1367 = vpack.c.b16 %v1265, %v1262
    %v1368 = vpack.c.b16 %v1269, %v1266
    %v1369 = vpack.c.b16 %v1270, %v1267
    %v1370 = vpack.c.b16 %v1271, %v1268
    %v1371 = vpack.c.b16 %v1275, %v1272
    %v1372 = vpack.c.b16 %v1276, %v1273
    %v1373 = vpack.c.b16 %v1277, %v1274
    %v1374 = vpack.c.b16 %v1281, %v1278
    %v1375 = vpack.c.b16 %v1282, %v1279
    %v1376 = vpack.c.b16 %v1283, %v1280
    %v1377 = vpack.c.b16 %v1287, %v1284
    %v1378 = vpack.c.b16 %v1288, %v1285
    %v1379 = vpack.c.b16 %v1289, %v1286
    %v1380 = vpack.c.b16 %v1293, %v1290
    %v1381 = vpack.c.b16 %v1294, %v1291
    %v1382 = vpack.c.b16 %v1295, %v1292
    %v1383 = vpack.c.b16 %v1299, %v1296
    %v1384 = vpack.c.b16 %v1300, %v1297
    %v1385 = vpack.c.b16 %v1301, %v1298
    %v1386 = vpack.c.b16 %v1305, %v1302
    %v1387 = vpack.c.b16 %v1306, %v1303
    %v1388 = vpack.c.b16 %v1307, %v1304
    %v1389 = vpack.c.b16 %v1311, %v1308
    %v1390 = vpack.c.b16 %v1312, %v1309
    %v1391 = vpack.c.b16 %v1313, %v1310
    %v1392 = vpack.c.b16 %v1317, %v1314
    %v1393 = vpack.c.b16 %v1318, %v1315
    %v1394 = vpack.c.b16 %v1319, %v1316
    %v1395 = vpack.c.b16 %v1323, %v1320
    %v1396 = vpack.c.b16 %v1324, %v1321
    %v1397 = vpack.c.b16 %v1325, %v1322
    %1470 = vmatprep.subr.bf16.mxu0 %v1348
    %1471 = vmatpush1.bf16.msra.mxu0 %v1347
    %1472 = vmatprep.subr.bf16.mxu0 %v1345
    %1473 = vmatpush1.bf16.msra.mxu0 %v1344
    %1474 = vmatprep.subr.bf16.mxu0 %v1342
    %1475 = vmatpush1.bf16.msra.mxu0 %v1341
    %1476 = vmatprep.subr.bf16.mxu0 %v1339
    %1477 = vmatpush1.bf16.msra.mxu0 %v1338
    %1478 = vmatprep.subr.bf16.mxu0 %v1336
    %1479 = vmatpush1.bf16.msra.mxu0 %v1335
    %1480 = vmatprep.subr.bf16.mxu0 %v1333
    %1481 = vmatpush1.bf16.msra.mxu0 %v1332
    %1482 = vmatprep.subr.bf16.mxu0 %v1330
    %1483 = vmatpush1.bf16.msra.mxu0 %v1329
    %1484 = vmatprep.subr.bf16.mxu0 %v1327
    %1485 = vmatpush1.bf16.msra.mxu0 %v1326
    %1486 = vmatprep.subr.bf16.mxu0 %v1372
    %1487 = vmatpush2.bf16.msra.mxu0 %v1371
    %1488 = vmatprep.subr.bf16.mxu0 %v1369
    %1489 = vmatpush2.bf16.msra.mxu0 %v1368
    %1490 = vmatprep.subr.bf16.mxu0 %v1366
    %1491 = vmatpush2.bf16.msra.mxu0 %v1365
    %1492 = vmatprep.subr.bf16.mxu0 %v1363
    %1493 = vmatpush2.bf16.msra.mxu0 %v1362
    %1494 = vmatprep.subr.bf16.mxu0 %v1360
    %1495 = vmatpush2.bf16.msra.mxu0 %v1359
    %1496 = vmatprep.subr.bf16.mxu0 %v1357
    %1497 = vmatpush2.bf16.msra.mxu0 %v1356
    %1498 = vmatprep.subr.bf16.mxu0 %v1354
    %1499 = vmatpush2.bf16.msra.mxu0 %v1353
    %1500 = vmatprep.subr.bf16.mxu0 %v1351
    %1501 = vmatpush2.bf16.msra.mxu0 %v1350
    %1502 = vmatprep.mubr.bf16.mxu0 %v970
    %1503 = vmatmul.mubr.bf16.gmra.mxu0 %v969
    %v1504 = vpop.f32.mrf.mxu0
    %v1505 = vadd.f32 %v1074, %v1504
    %v1506 = vpop.f32.mrf.mxu0
    %v1507 = vadd.f32 %v1078, %v1506
    %v1508 = vpop.f32.mrf.mxu0
    %v1509 = vpop.f32.mrf.mxu0
    %1510 = vdwg.mxu0
    %1511 = vmatprep.subr.bf16.mxu0 %v1396
    %1512 = vmatpush1.bf16.msra.mxu0 %v1395
    %1513 = vmatprep.subr.bf16.mxu0 %v1393
    %1514 = vmatpush1.bf16.msra.mxu0 %v1392
    %1515 = vmatprep.subr.bf16.mxu0 %v1390
    %1516 = vmatpush1.bf16.msra.mxu0 %v1389
    %1517 = vmatprep.subr.bf16.mxu0 %v1387
    %1518 = vmatpush1.bf16.msra.mxu0 %v1386
    %1519 = vmatprep.subr.bf16.mxu0 %v1384
    %1520 = vmatpush1.bf16.msra.mxu0 %v1383
    %1521 = vmatprep.subr.bf16.mxu0 %v1381
    %1522 = vmatpush1.bf16.msra.mxu0 %v1380
    %1523 = vmatprep.subr.bf16.mxu0 %v1378
    %1524 = vmatpush1.bf16.msra.mxu0 %v1377
    %1525 = vmatprep.subr.bf16.mxu0 %v1375
    %1526 = vmatpush1.bf16.msra.mxu0 %v1374
    %1527 = vmatprep.subr.bf16.mxu0 0
    %1528 = vmatpush2.bf16.msra.mxu0 0
    %1529 = vmatprep.subr.bf16.mxu0 0
    %1530 = vmatpush2.bf16.msra.mxu0 0
    %1531 = vmatprep.subr.bf16.mxu0 0
    %1532 = vmatpush2.bf16.msra.mxu0 0
    %1533 = vmatprep.subr.bf16.mxu0 0
    %1534 = vmatpush2.bf16.msra.mxu0 0
    %1535 = vmatprep.subr.bf16.mxu0 0
    %1536 = vmatpush2.bf16.msra.mxu0 0
    %1537 = vmatprep.subr.bf16.mxu0 0
    %1538 = vmatpush2.bf16.msra.mxu0 0
    %1539 = vmatprep.subr.bf16.mxu0 0
    %1540 = vmatpush2.bf16.msra.mxu0 0
    %1541 = vmatprep.subr.bf16.mxu0 0
    %1542 = vmatpush2.bf16.msra.mxu0 0
    %1543 = vmatprep.mubr.bf16.mxu0 0
    %1544 = vmatmul.mubr.bf16.gmra.mxu0 %v971
    %v1545 = vpop.f32.mrf.mxu0
    %v1546 = vadd.f32 %v1505, %v1545
    %v1547 = vpop.f32.mrf.mxu0
    %v1548 = vadd.f32 %v1507, %v1547
    %v1549 = vpop.f32.mrf.mxu0
    %v1550 = vpop.f32.mrf.mxu0
    %1551 = vdwg.mxu0
    %1552 = vmatprep.subr.bf16.mxu0 0
    %1553 = vmatpush1.bf16.msra.mxu0 %v1349
    %1554 = vmatprep.subr.bf16.mxu0 0
    %1555 = vmatpush1.bf16.msra.mxu0 %v1346
    %1556 = vmatprep.subr.bf16.mxu0 0
    %1557 = vmatpush1.bf16.msra.mxu0 %v1343
    %1558 = vmatprep.subr.bf16.mxu0 0
    %1559 = vmatpush1.bf16.msra.mxu0 %v1340
    %1560 = vmatprep.subr.bf16.mxu0 0
    %1561 = vmatpush1.bf16.msra.mxu0 %v1337
    %1562 = vmatprep.subr.bf16.mxu0 0
    %1563 = vmatpush1.bf16.msra.mxu0 %v1334
    %1564 = vmatprep.subr.bf16.mxu0 0
    %1565 = vmatpush1.bf16.msra.mxu0 %v1331
    %1566 = vmatprep.subr.bf16.mxu0 0
    %1567 = vmatpush1.bf16.msra.mxu0 %v1328
    %1568 = vmatprep.subr.bf16.mxu0 0
    %1569 = vmatpush2.bf16.msra.mxu0 %v1373
    %1570 = vmatprep.subr.bf16.mxu0 0
    %1571 = vmatpush2.bf16.msra.mxu0 %v1370
    %1572 = vmatprep.subr.bf16.mxu0 0
    %1573 = vmatpush2.bf16.msra.mxu0 %v1367
    %1574 = vmatprep.subr.bf16.mxu0 0
    %1575 = vmatpush2.bf16.msra.mxu0 %v1364
    %1576 = vmatprep.subr.bf16.mxu0 0
    %1577 = vmatpush2.bf16.msra.mxu0 %v1361
    %1578 = vmatprep.subr.bf16.mxu0 0
    %1579 = vmatpush2.bf16.msra.mxu0 %v1358
    %1580 = vmatprep.subr.bf16.mxu0 0
    %1581 = vmatpush2.bf16.msra.mxu0 %v1355
    %1582 = vmatprep.subr.bf16.mxu0 0
    %1583 = vmatpush2.bf16.msra.mxu0 %v1352
    %1584 = vmatprep.mubr.bf16.mxu0 %v970
    %1585 = vmatmul.mubr.bf16.gmra.mxu0 %v969
    %v1586 = vpop.f32.mrf.mxu0
    %v1587 = vadd.f32 %v1082, %v1586
    %v1588 = vpop.f32.mrf.mxu0
    %v1589 = vpop.f32.mrf.mxu0
    %v1590 = vpop.f32.mrf.mxu0
    %1591 = vdwg.mxu0
    %1592 = vmatprep.subr.bf16.mxu0 0
    %1593 = vmatpush1.bf16.msra.mxu0 %v1397
    %1594 = vmatprep.subr.bf16.mxu0 0
    %1595 = vmatpush1.bf16.msra.mxu0 %v1394
    %1596 = vmatprep.subr.bf16.mxu0 0
    %1597 = vmatpush1.bf16.msra.mxu0 %v1391
    %1598 = vmatprep.subr.bf16.mxu0 0
    %1599 = vmatpush1.bf16.msra.mxu0 %v1388
    %1600 = vmatprep.subr.bf16.mxu0 0
    %1601 = vmatpush1.bf16.msra.mxu0 %v1385
    %1602 = vmatprep.subr.bf16.mxu0 0
    %1603 = vmatpush1.bf16.msra.mxu0 %v1382
    %1604 = vmatprep.subr.bf16.mxu0 0
    %1605 = vmatpush1.bf16.msra.mxu0 %v1379
    %1606 = vmatprep.subr.bf16.mxu0 0
    %1607 = vmatpush1.bf16.msra.mxu0 %v1376
    %1608 = vmatprep.subr.bf16.mxu0 0
    %1609 = vmatpush2.bf16.msra.mxu0 0
    %1610 = vmatprep.subr.bf16.mxu0 0
    %1611 = vmatpush2.bf16.msra.mxu0 0
    %1612 = vmatprep.subr.bf16.mxu0 0
    %1613 = vmatpush2.bf16.msra.mxu0 0
    %1614 = vmatprep.subr.bf16.mxu0 0
    %1615 = vmatpush2.bf16.msra.mxu0 0
    %1616 = vmatprep.subr.bf16.mxu0 0
    %1617 = vmatpush2.bf16.msra.mxu0 0
    %1618 = vmatprep.subr.bf16.mxu0 0
    %1619 = vmatpush2.bf16.msra.mxu0 0
    %1620 = vmatprep.subr.bf16.mxu0 0
    %1621 = vmatpush2.bf16.msra.mxu0 0
    %1622 = vmatprep.subr.bf16.mxu0 0
    %1623 = vmatpush2.bf16.msra.mxu0 0
    %1624 = vmatprep.mubr.bf16.mxu0 0
    %1625 = vmatmul.mubr.bf16.gmra.mxu0 %v971
    %v1626 = vpop.f32.mrf.mxu0
    %v1627 = vadd.f32 %v1587, %v1626
    %v1628 = vpop.f32.mrf.mxu0
    %v1629 = vpop.f32.mrf.mxu0
    %v1630 = vpop.f32.mrf.mxu0
    %1631 = vdwg.mxu0
    %v1632 = vmax.f32 %v1546, 0.0
    %v1633 = vmax.f32 %v1548, 0.0
    %v1634 = vmax.f32 %v1627, 0.0
    %v1635 = vpack.c.bf16 %v1632, %v1632
    %v1636 = vpack.c.bf16 %v1633, %v1633
    %v1637 = vpack.c.bf16 %v1634, %v1634
    %v1638 = vld [vmem:[#allocation8 + $0xc] sm:$0xff]
    %v1639 = vld [vmem:[#allocation8 + $0x20] sm:$0xff]
    %v1640 = vld [vmem:[#allocation8 + $0x34] sm:$0xff]
    %v1641 = vld [vmem:[#allocation8 + $0x48] sm:$0xff]
    %v1642 = vld [vmem:[#allocation8 + $0x5c] sm:$0xff]
    %v1643 = vld [vmem:[#allocation8 + $0x70] sm:$0xff]
    %v1644 = vld [vmem:[#allocation8 + $0x84] sm:$0xff]
    %v1645 = vld [vmem:[#allocation8 + $0x98] sm:$0xff]
    %v1646 = vld [vmem:[#allocation8 + $0xac] sm:$0xff]
    %v1647 = vld [vmem:[#allocation8 + $0xc0] sm:$0xff]
    %v1648 = vld [vmem:[#allocation8 + $0xd4] sm:$0xff]
    %v1649 = vld [vmem:[#allocation8 + $0xe8] sm:$0xff]
    %v1650 = vld [vmem:[#allocation8 + $0xfc] sm:$0xff]
    %v1651 = vld [vmem:[#allocation8 + $0x110] sm:$0xff]
    %v1652 = vld [vmem:[#allocation8 + $0x124] sm:$0xff]
    %v1653 = vld [vmem:[#allocation8 + $0x138] sm:$0xff]
    %v1654 = vld [vmem:[#allocation8 + $0x14c] sm:$0xff]
    %v1655 = vld [vmem:[#allocation8 + $0x160] sm:$0xff]
    %v1656 = vld [vmem:[#allocation8 + $0x174] sm:$0xff]
    %v1657 = vld [vmem:[#allocation8 + $0x188] sm:$0xff]
    %v1658 = vld [vmem:[#allocation8 + $0x19c] sm:$0xff]
    %v1659 = vld [vmem:[#allocation8 + $0x1b0] sm:$0xff]
    %v1660 = vld [vmem:[#allocation8 + $0x1c4] sm:$0xff]
    %v1661 = vld [vmem:[#allocation8 + $0x1d8] sm:$0xff]
    %v1662 = vld [vmem:[#allocation8 + $0x1ec] sm:$0xff]
    %v1663 = vld [vmem:[#allocation8 + $0x200] sm:$0xff]
    %v1664 = vld [vmem:[#allocation8 + $0x214] sm:$0xff]
    %v1665 = vld [vmem:[#allocation8 + $0x228] sm:$0xff]
    %v1666 = vld [vmem:[#allocation8 + $0x23c] sm:$0xff]
    %v1667 = vld [vmem:[#allocation8 + $0x250] sm:$0xff]
    %v1668 = vld [vmem:[#allocation8 + $0x264] sm:$0xff]
    %v1669 = vld [vmem:[#allocation8 + $0x278] sm:$0xff]
    %v1670 = vld [vmem:[#allocation8 + $0x28c] sm:$0xff]
    %v1671 = vld [vmem:[#allocation8 + $0x2a0] sm:$0xff]
    %v1672 = vld [vmem:[#allocation8 + $0x2b4] sm:$0xff]
    %v1673 = vld [vmem:[#allocation8 + $0x2c8] sm:$0xff]
    %v1674 = vld [vmem:[#allocation8 + $0x2dc] sm:$0xff]
    %v1675 = vld [vmem:[#allocation8 + $0x2f0] sm:$0xff]
    %v1676 = vld [vmem:[#allocation8 + $0x304] sm:$0xff]
    %v1677 = vld [vmem:[#allocation8 + $0x318] sm:$0xff]
    %v1678 = vld [vmem:[#allocation8 + $0x32c] sm:$0xff]
    %v1679 = vld [vmem:[#allocation8 + $0x340] sm:$0xff]
    %v1680 = vld [vmem:[#allocation8 + $0x354] sm:$0xff]
    %v1681 = vld [vmem:[#allocation8 + $0x368] sm:$0xff]
    %v1682 = vld [vmem:[#allocation8 + $0x37c] sm:$0xff]
    %v1683 = vld [vmem:[#allocation8 + $0x390] sm:$0xff]
    %v1684 = vld [vmem:[#allocation8 + $0x3a4] sm:$0xff]
    %v1685 = vld [vmem:[#allocation8 + $0x3b8] sm:$0xff]
    %s1686 = scalar_lea.vmem [#allocation12], 2
    %v1687 = vld [vmem:[%s1686] ss:$8 sm:$0x3]
    %v1689 = vlaneseq
    %v1690 = vshrl.u32 %v1689, 7
    %v1691 = vsub.s32 0, %v1690
    %v1692 = vrot.slane %v1687, %v1691
    %v1693 = vlaneseq
    %v1694 = vshrl.u32 %v1693, 7
    %v1695 = vsub.s32 1, %v1694
    %v1696 = vrot.slane %v1687, %v1695
    %v1747 = vunpack.c.l.b16 %v1638
    %v1748 = vunpack.c.h.b16 %v1638
    %v1749 = vunpack.c.l.b16 %v1639
    %v1750 = vunpack.c.h.b16 %v1639
    %v1751 = vunpack.c.l.b16 %v1640
    %v1752 = vunpack.c.h.b16 %v1640
    %v1753 = vunpack.c.l.b16 %v1641
    %v1754 = vunpack.c.h.b16 %v1641
    %v1755 = vunpack.c.l.b16 %v1642
    %v1756 = vunpack.c.h.b16 %v1642
    %v1757 = vunpack.c.l.b16 %v1643
    %v1758 = vunpack.c.h.b16 %v1643
    %v1759 = vunpack.c.l.b16 %v1644
    %v1760 = vunpack.c.h.b16 %v1644
    %v1761 = vunpack.c.l.b16 %v1645
    %v1762 = vunpack.c.h.b16 %v1645
    %v1763 = vunpack.c.l.b16 %v1646
    %v1764 = vunpack.c.h.b16 %v1646
    %v1765 = vunpack.c.l.b16 %v1647
    %v1766 = vunpack.c.h.b16 %v1647
    %v1767 = vunpack.c.l.b16 %v1648
    %v1768 = vunpack.c.h.b16 %v1648
    %v1769 = vunpack.c.l.b16 %v1649
    %v1770 = vunpack.c.h.b16 %v1649
    %v1771 = vunpack.c.l.b16 %v1650
    %v1772 = vunpack.c.h.b16 %v1650
    %v1773 = vunpack.c.l.b16 %v1651
    %v1774 = vunpack.c.h.b16 %v1651
    %v1775 = vunpack.c.l.b16 %v1652
    %v1776 = vunpack.c.h.b16 %v1652
    %v1777 = vunpack.c.l.b16 %v1653
    %v1778 = vunpack.c.h.b16 %v1653
    %v1779 = vunpack.c.l.b16 %v1654
    %v1780 = vunpack.c.h.b16 %v1654
    %v1781 = vunpack.c.l.b16 %v1655
    %v1782 = vunpack.c.h.b16 %v1655
    %v1783 = vunpack.c.l.b16 %v1656
    %v1784 = vunpack.c.h.b16 %v1656
    %v1785 = vunpack.c.l.b16 %v1657
    %v1786 = vunpack.c.h.b16 %v1657
    %v1787 = vunpack.c.l.b16 %v1658
    %v1788 = vunpack.c.h.b16 %v1658
    %v1789 = vunpack.c.l.b16 %v1659
    %v1790 = vunpack.c.h.b16 %v1659
    %v1791 = vunpack.c.l.b16 %v1660
    %v1792 = vunpack.c.h.b16 %v1660
    %v1793 = vunpack.c.l.b16 %v1661
    %v1794 = vunpack.c.h.b16 %v1661
    %v1795 = vunpack.c.l.b16 %v1662
    %v1796 = vunpack.c.h.b16 %v1662
    %v1797 = vunpack.c.l.b16 %v1663
    %v1798 = vunpack.c.h.b16 %v1663
    %v1799 = vunpack.c.l.b16 %v1664
    %v1800 = vunpack.c.h.b16 %v1664
    %v1801 = vunpack.c.l.b16 %v1665
    %v1802 = vunpack.c.h.b16 %v1665
    %v1803 = vunpack.c.l.b16 %v1666
    %v1804 = vunpack.c.h.b16 %v1666
    %v1805 = vunpack.c.l.b16 %v1667
    %v1806 = vunpack.c.h.b16 %v1667
    %v1807 = vunpack.c.l.b16 %v1668
    %v1808 = vunpack.c.h.b16 %v1668
    %v1809 = vunpack.c.l.b16 %v1669
    %v1810 = vunpack.c.h.b16 %v1669
    %v1811 = vunpack.c.l.b16 %v1670
    %v1812 = vunpack.c.h.b16 %v1670
    %v1813 = vunpack.c.l.b16 %v1671
    %v1814 = vunpack.c.h.b16 %v1671
    %v1815 = vunpack.c.l.b16 %v1672
    %v1816 = vunpack.c.h.b16 %v1672
    %v1817 = vunpack.c.l.b16 %v1673
    %v1818 = vunpack.c.h.b16 %v1673
    %v1819 = vunpack.c.l.b16 %v1674
    %v1820 = vunpack.c.h.b16 %v1674
    %v1821 = vunpack.c.l.b16 %v1675
    %v1822 = vunpack.c.h.b16 %v1675
    %v1823 = vunpack.c.l.b16 %v1676
    %v1824 = vunpack.c.h.b16 %v1676
    %v1825 = vunpack.c.l.b16 %v1677
    %v1826 = vunpack.c.h.b16 %v1677
    %v1827 = vunpack.c.l.b16 %v1678
    %v1828 = vunpack.c.h.b16 %v1678
    %v1829 = vunpack.c.l.b16 %v1679
    %v1830 = vunpack.c.h.b16 %v1679
    %v1831 = vunpack.c.l.b16 %v1680
    %v1832 = vunpack.c.h.b16 %v1680
    %v1833 = vunpack.c.l.b16 %v1681
    %v1834 = vunpack.c.h.b16 %v1681
    %v1835 = vunpack.c.l.b16 %v1682
    %v1836 = vunpack.c.h.b16 %v1682
    %v1837 = vunpack.c.l.b16 %v1683
    %v1838 = vunpack.c.h.b16 %v1683
    %v1839 = vunpack.c.l.b16 %v1684
    %v1840 = vunpack.c.h.b16 %v1684
    %v1841 = vunpack.c.l.b16 %v1685
    %v1842 = vunpack.c.h.b16 %v1685
    %v1843 = vpack.c.b16 %v1749, %v1747
    %v1844 = vpack.c.b16 %v1750, %v1748
    %v1845 = vpack.c.b16 %v1753, %v1751
    %v1846 = vpack.c.b16 %v1754, %v1752
    %v1847 = vpack.c.b16 %v1757, %v1755
    %v1848 = vpack.c.b16 %v1758, %v1756
    %v1849 = vpack.c.b16 %v1761, %v1759
    %v1850 = vpack.c.b16 %v1762, %v1760
    %v1851 = vpack.c.b16 %v1765, %v1763
    %v1852 = vpack.c.b16 %v1766, %v1764
    %v1853 = vpack.c.b16 %v1769, %v1767
    %v1854 = vpack.c.b16 %v1770, %v1768
    %v1855 = vpack.c.b16 %v1773, %v1771
    %v1856 = vpack.c.b16 %v1774, %v1772
    %v1857 = vpack.c.b16 %v1777, %v1775
    %v1858 = vpack.c.b16 %v1778, %v1776
    %v1859 = vpack.c.b16 %v1781, %v1779
    %v1860 = vpack.c.b16 %v1782, %v1780
    %v1861 = vpack.c.b16 %v1785, %v1783
    %v1862 = vpack.c.b16 %v1786, %v1784
    %v1863 = vpack.c.b16 %v1789, %v1787
    %v1864 = vpack.c.b16 %v1790, %v1788
    %v1865 = vpack.c.b16 %v1793, %v1791
    %v1866 = vpack.c.b16 %v1794, %v1792
    %v1867 = vpack.c.b16 %v1797, %v1795
    %v1868 = vpack.c.b16 %v1798, %v1796
    %v1869 = vpack.c.b16 %v1801, %v1799
    %v1870 = vpack.c.b16 %v1802, %v1800
    %v1871 = vpack.c.b16 %v1805, %v1803
    %v1872 = vpack.c.b16 %v1806, %v1804
    %v1873 = vpack.c.b16 %v1809, %v1807
    %v1874 = vpack.c.b16 %v1810, %v1808
    %v1875 = vpack.c.b16 %v1813, %v1811
    %v1876 = vpack.c.b16 %v1814, %v1812
    %v1877 = vpack.c.b16 %v1817, %v1815
    %v1878 = vpack.c.b16 %v1818, %v1816
    %v1879 = vpack.c.b16 %v1821, %v1819
    %v1880 = vpack.c.b16 %v1822, %v1820
    %v1881 = vpack.c.b16 %v1825, %v1823
    %v1882 = vpack.c.b16 %v1826, %v1824
    %v1883 = vpack.c.b16 %v1829, %v1827
    %v1884 = vpack.c.b16 %v1830, %v1828
    %v1885 = vpack.c.b16 %v1833, %v1831
    %v1886 = vpack.c.b16 %v1834, %v1832
    %v1887 = vpack.c.b16 %v1837, %v1835
    %v1888 = vpack.c.b16 %v1838, %v1836
    %v1889 = vpack.c.b16 %v1841, %v1839
    %v1890 = vpack.c.b16 %v1842, %v1840
    %1939 = vmatprep.subr.bf16.mxu0 %v1858
    %1940 = vmatpush1.bf16.msra.mxu0 %v1857
    %1941 = vmatprep.subr.bf16.mxu0 %v1856
    %1942 = vmatpush1.bf16.msra.mxu0 %v1855
    %1943 = vmatprep.subr.bf16.mxu0 %v1854
    %1944 = vmatpush1.bf16.msra.mxu0 %v1853
    %1945 = vmatprep.subr.bf16.mxu0 %v1852
    %1946 = vmatpush1.bf16.msra.mxu0 %v1851
    %1947 = vmatprep.subr.bf16.mxu0 %v1850
    %1948 = vmatpush1.bf16.msra.mxu0 %v1849
    %1949 = vmatprep.subr.bf16.mxu0 %v1848
    %1950 = vmatpush1.bf16.msra.mxu0 %v1847
    %1951 = vmatprep.subr.bf16.mxu0 %v1846
    %1952 = vmatpush1.bf16.msra.mxu0 %v1845
    %1953 = vmatprep.subr.bf16.mxu0 %v1844
    %1954 = vmatpush1.bf16.msra.mxu0 %v1843
    %1955 = vmatprep.subr.bf16.mxu0 %v1874
    %1956 = vmatpush2.bf16.msra.mxu0 %v1873
    %1957 = vmatprep.subr.bf16.mxu0 %v1872
    %1958 = vmatpush2.bf16.msra.mxu0 %v1871
    %1959 = vmatprep.subr.bf16.mxu0 %v1870
    %1960 = vmatpush2.bf16.msra.mxu0 %v1869
    %1961 = vmatprep.subr.bf16.mxu0 %v1868
    %1962 = vmatpush2.bf16.msra.mxu0 %v1867
    %1963 = vmatprep.subr.bf16.mxu0 %v1866
    %1964 = vmatpush2.bf16.msra.mxu0 %v1865
    %1965 = vmatprep.subr.bf16.mxu0 %v1864
    %1966 = vmatpush2.bf16.msra.mxu0 %v1863
    %1967 = vmatprep.subr.bf16.mxu0 %v1862
    %1968 = vmatpush2.bf16.msra.mxu0 %v1861
    %1969 = vmatprep.subr.bf16.mxu0 %v1860
    %1970 = vmatpush2.bf16.msra.mxu0 %v1859
    %1971 = vmatprep.mubr.bf16.mxu0 %v1636
    %1972 = vmatmul.mubr.bf16.gmra.mxu0 %v1635
    %v1973 = vpop.f32.mrf.mxu0
    %v1974 = vadd.f32 %v1692, %v1973
    %v1975 = vpop.f32.mrf.mxu0
    %v1976 = vadd.f32 %v1696, %v1975
    %v1977 = vpop.f32.mrf.mxu0
    %v1978 = vpop.f32.mrf.mxu0
    %1979 = vdwg.mxu0
    %1980 = vmatprep.subr.bf16.mxu0 %v1890
    %1981 = vmatpush1.bf16.msra.mxu0 %v1889
    %1982 = vmatprep.subr.bf16.mxu0 %v1888
    %1983 = vmatpush1.bf16.msra.mxu0 %v1887
    %1984 = vmatprep.subr.bf16.mxu0 %v1886
    %1985 = vmatpush1.bf16.msra.mxu0 %v1885
    %1986 = vmatprep.subr.bf16.mxu0 %v1884
    %1987 = vmatpush1.bf16.msra.mxu0 %v1883
    %1988 = vmatprep.subr.bf16.mxu0 %v1882
    %1989 = vmatpush1.bf16.msra.mxu0 %v1881
    %1990 = vmatprep.subr.bf16.mxu0 %v1880
    %1991 = vmatpush1.bf16.msra.mxu0 %v1879
    %1992 = vmatprep.subr.bf16.mxu0 %v1878
    %1993 = vmatpush1.bf16.msra.mxu0 %v1877
    %1994 = vmatprep.subr.bf16.mxu0 %v1876
    %1995 = vmatpush1.bf16.msra.mxu0 %v1875
    %1996 = vmatprep.subr.bf16.mxu0 0
    %1997 = vmatpush2.bf16.msra.mxu0 0
    %1998 = vmatprep.subr.bf16.mxu0 0
    %1999 = vmatpush2.bf16.msra.mxu0 0
    %2000 = vmatprep.subr.bf16.mxu0 0
    %2001 = vmatpush2.bf16.msra.mxu0 0
    %2002 = vmatprep.subr.bf16.mxu0 0
    %2003 = vmatpush2.bf16.msra.mxu0 0
    %2004 = vmatprep.subr.bf16.mxu0 0
    %2005 = vmatpush2.bf16.msra.mxu0 0
    %2006 = vmatprep.subr.bf16.mxu0 0
    %2007 = vmatpush2.bf16.msra.mxu0 0
    %2008 = vmatprep.subr.bf16.mxu0 0
    %2009 = vmatpush2.bf16.msra.mxu0 0
    %2010 = vmatprep.subr.bf16.mxu0 0
    %2011 = vmatpush2.bf16.msra.mxu0 0
    %2012 = vmatprep.mubr.bf16.mxu0 0
    %2013 = vmatmul.mubr.bf16.gmra.mxu0 %v1637
    %v2014 = vpop.f32.mrf.mxu0
    %v2015 = vadd.f32 %v1974, %v2014
    %v2016 = vpop.f32.mrf.mxu0
    %v2017 = vadd.f32 %v1976, %v2016
    %v2018 = vpop.f32.mrf.mxu0
    %v2019 = vpop.f32.mrf.mxu0
    %2020 = vdwg.mxu0
    %v2021 = vmax.f32 %v2015, 0.0
    %v2022 = vmax.f32 %v2017, 0.0
    %v2023 = vpack.c.bf16 %v2021, %v2021
    %v2024 = vpack.c.bf16 %v2022, %v2022
    %v2025 = vld [vmem:[#allocation9] sm:$0xff]
    %v2026 = vld [vmem:[#allocation9 + $0x14] sm:$0xff]
    %v2027 = vld [vmem:[#allocation9 + $0x28] sm:$0xff]
    %v2028 = vld [vmem:[#allocation9 + $0x3c] sm:$0xff]
    %v2029 = vld [vmem:[#allocation9 + $0x50] sm:$0xff]
    %v2030 = vld [vmem:[#allocation9 + $0x64] sm:$0xff]
    %v2031 = vld [vmem:[#allocation9 + $0x78] sm:$0xff]
    %v2032 = vld [vmem:[#allocation9 + $0x8c] sm:$0xff]
    %v2033 = vld [vmem:[#allocation9 + $0xa0] sm:$0xff]
    %v2034 = vld [vmem:[#allocation9 + $0xb4] sm:$0xff]
    %v2035 = vld [vmem:[#allocation9 + $0xc8] sm:$0xff]
    %v2036 = vld [vmem:[#allocation9 + $0xdc] sm:$0xff]
    %v2037 = vld [vmem:[#allocation9 + $0xf0] sm:$0xff]
    %v2038 = vld [vmem:[#allocation9 + $0x104] sm:$0xff]
    %v2039 = vld [vmem:[#allocation9 + $0x118] sm:$0xff]
    %v2040 = vld [vmem:[#allocation9 + $0x12c] sm:$0xff]
    %v2041 = vld [vmem:[#allocation9 + $0x140] sm:$0xff]
    %v2042 = vld [vmem:[#allocation9 + $0x154] sm:$0xff]
    %v2043 = vld [vmem:[#allocation9 + $0x168] sm:$0xff]
    %v2044 = vld [vmem:[#allocation9 + $0x17c] sm:$0xff]
    %v2045 = vld [vmem:[#allocation9 + $0x190] sm:$0xff]
    %v2046 = vld [vmem:[#allocation9 + $0x1a4] sm:$0xff]
    %v2047 = vld [vmem:[#allocation9 + $0x1b8] sm:$0xff]
    %v2048 = vld [vmem:[#allocation9 + $0x1cc] sm:$0xff]
    %v2049 = vld [vmem:[#allocation9 + $0x1e0] sm:$0xff]
    %v2050 = vld [vmem:[#allocation9 + $0x1f4] sm:$0xff]
    %v2051 = vld [vmem:[#allocation9 + $0x208] sm:$0xff]
    %v2052 = vld [vmem:[#allocation9 + $0x21c] sm:$0xff]
    %v2053 = vld [vmem:[#allocation9 + $0x230] sm:$0xff]
    %v2054 = vld [vmem:[#allocation9 + $0x244] sm:$0xff]
    %v2055 = vld [vmem:[#allocation9 + $0x258] sm:$0xff]
    %v2056 = vld [vmem:[#allocation9 + $0x26c] sm:$0xff]
    %s2057 = scalar_lea.vmem [#allocation12], 3
    %v2058 = vld [vmem:[%s2057] ss:$8 sm:$0x3]
    %v2060 = vlaneseq
    %v2061 = vshrl.u32 %v2060, 7
    %v2062 = vsub.s32 0, %v2061
    %v2063 = vrot.slane %v2058, %v2062
    %v2064 = vlaneseq
    %v2065 = vshrl.u32 %v2064, 7
    %v2066 = vsub.s32 1, %v2065
    %v2067 = vrot.slane %v2058, %v2066
    %v2102 = vunpack.c.l.b16 %v2025
    %v2103 = vunpack.c.h.b16 %v2025
    %v2104 = vunpack.c.l.b16 %v2026
    %v2105 = vunpack.c.h.b16 %v2026
    %v2106 = vunpack.c.l.b16 %v2027
    %v2107 = vunpack.c.h.b16 %v2027
    %v2108 = vunpack.c.l.b16 %v2028
    %v2109 = vunpack.c.h.b16 %v2028
    %v2110 = vunpack.c.l.b16 %v2029
    %v2111 = vunpack.c.h.b16 %v2029
    %v2112 = vunpack.c.l.b16 %v2030
    %v2113 = vunpack.c.h.b16 %v2030
    %v2114 = vunpack.c.l.b16 %v2031
    %v2115 = vunpack.c.h.b16 %v2031
    %v2116 = vunpack.c.l.b16 %v2032
    %v2117 = vunpack.c.h.b16 %v2032
    %v2118 = vunpack.c.l.b16 %v2033
    %v2119 = vunpack.c.h.b16 %v2033
    %v2120 = vunpack.c.l.b16 %v2034
    %v2121 = vunpack.c.h.b16 %v2034
    %v2122 = vunpack.c.l.b16 %v2035
    %v2123 = vunpack.c.h.b16 %v2035
    %v2124 = vunpack.c.l.b16 %v2036
    %v2125 = vunpack.c.h.b16 %v2036
    %v2126 = vunpack.c.l.b16 %v2037
    %v2127 = vunpack.c.h.b16 %v2037
    %v2128 = vunpack.c.l.b16 %v2038
    %v2129 = vunpack.c.h.b16 %v2038
    %v2130 = vunpack.c.l.b16 %v2039
    %v2131 = vunpack.c.h.b16 %v2039
    %v2132 = vunpack.c.l.b16 %v2040
    %v2133 = vunpack.c.h.b16 %v2040
    %v2134 = vunpack.c.l.b16 %v2041
    %v2135 = vunpack.c.h.b16 %v2041
    %v2136 = vunpack.c.l.b16 %v2042
    %v2137 = vunpack.c.h.b16 %v2042
    %v2138 = vunpack.c.l.b16 %v2043
    %v2139 = vunpack.c.h.b16 %v2043
    %v2140 = vunpack.c.l.b16 %v2044
    %v2141 = vunpack.c.h.b16 %v2044
    %v2142 = vunpack.c.l.b16 %v2045
    %v2143 = vunpack.c.h.b16 %v2045
    %v2144 = vunpack.c.l.b16 %v2046
    %v2145 = vunpack.c.h.b16 %v2046
    %v2146 = vunpack.c.l.b16 %v2047
    %v2147 = vunpack.c.h.b16 %v2047
    %v2148 = vunpack.c.l.b16 %v2048
    %v2149 = vunpack.c.h.b16 %v2048
    %v2150 = vunpack.c.l.b16 %v2049
    %v2151 = vunpack.c.h.b16 %v2049
    %v2152 = vunpack.c.l.b16 %v2050
    %v2153 = vunpack.c.h.b16 %v2050
    %v2154 = vunpack.c.l.b16 %v2051
    %v2155 = vunpack.c.h.b16 %v2051
    %v2156 = vunpack.c.l.b16 %v2052
    %v2157 = vunpack.c.h.b16 %v2052
    %v2158 = vunpack.c.l.b16 %v2053
    %v2159 = vunpack.c.h.b16 %v2053
    %v2160 = vunpack.c.l.b16 %v2054
    %v2161 = vunpack.c.h.b16 %v2054
    %v2162 = vunpack.c.l.b16 %v2055
    %v2163 = vunpack.c.h.b16 %v2055
    %v2164 = vunpack.c.l.b16 %v2056
    %v2165 = vunpack.c.h.b16 %v2056
    %v2166 = vpack.c.b16 %v2104, %v2102
    %v2167 = vpack.c.b16 %v2105, %v2103
    %v2168 = vpack.c.b16 %v2108, %v2106
    %v2169 = vpack.c.b16 %v2109, %v2107
    %v2170 = vpack.c.b16 %v2112, %v2110
    %v2171 = vpack.c.b16 %v2113, %v2111
    %v2172 = vpack.c.b16 %v2116, %v2114
    %v2173 = vpack.c.b16 %v2117, %v2115
    %v2174 = vpack.c.b16 %v2120, %v2118
    %v2175 = vpack.c.b16 %v2121, %v2119
    %v2176 = vpack.c.b16 %v2124, %v2122
    %v2177 = vpack.c.b16 %v2125, %v2123
    %v2178 = vpack.c.b16 %v2128, %v2126
    %v2179 = vpack.c.b16 %v2129, %v2127
    %v2180 = vpack.c.b16 %v2132, %v2130
    %v2181 = vpack.c.b16 %v2133, %v2131
    %v2182 = vpack.c.b16 %v2136, %v2134
    %v2183 = vpack.c.b16 %v2137, %v2135
    %v2184 = vpack.c.b16 %v2140, %v2138
    %v2185 = vpack.c.b16 %v2141, %v2139
    %v2186 = vpack.c.b16 %v2144, %v2142
    %v2187 = vpack.c.b16 %v2145, %v2143
    %v2188 = vpack.c.b16 %v2148, %v2146
    %v2189 = vpack.c.b16 %v2149, %v2147
    %v2190 = vpack.c.b16 %v2152, %v2150
    %v2191 = vpack.c.b16 %v2153, %v2151
    %v2192 = vpack.c.b16 %v2156, %v2154
    %v2193 = vpack.c.b16 %v2157, %v2155
    %v2194 = vpack.c.b16 %v2160, %v2158
    %v2195 = vpack.c.b16 %v2161, %v2159
    %v2196 = vpack.c.b16 %v2164, %v2162
    %v2197 = vpack.c.b16 %v2165, %v2163
    %2230 = vmatprep.subr.bf16.mxu0 %v2181
    %2231 = vmatpush1.bf16.msra.mxu0 %v2180
    %2232 = vmatprep.subr.bf16.mxu0 %v2179
    %2233 = vmatpush1.bf16.msra.mxu0 %v2178
    %2234 = vmatprep.subr.bf16.mxu0 %v2177
    %2235 = vmatpush1.bf16.msra.mxu0 %v2176
    %2236 = vmatprep.subr.bf16.mxu0 %v2175
    %2237 = vmatpush1.bf16.msra.mxu0 %v2174
    %2238 = vmatprep.subr.bf16.mxu0 %v2173
    %2239 = vmatpush1.bf16.msra.mxu0 %v2172
    %2240 = vmatprep.subr.bf16.mxu0 %v2171
    %2241 = vmatpush1.bf16.msra.mxu0 %v2170
    %2242 = vmatprep.subr.bf16.mxu0 %v2169
    %2243 = vmatpush1.bf16.msra.mxu0 %v2168
    %2244 = vmatprep.subr.bf16.mxu0 %v2167
    %2245 = vmatpush1.bf16.msra.mxu0 %v2166
    %2246 = vmatprep.subr.bf16.mxu0 %v2197
    %2247 = vmatpush2.bf16.msra.mxu0 %v2196
    %2248 = vmatprep.subr.bf16.mxu0 %v2195
    %2249 = vmatpush2.bf16.msra.mxu0 %v2194
    %2250 = vmatprep.subr.bf16.mxu0 %v2193
    %2251 = vmatpush2.bf16.msra.mxu0 %v2192
    %2252 = vmatprep.subr.bf16.mxu0 %v2191
    %2253 = vmatpush2.bf16.msra.mxu0 %v2190
    %2254 = vmatprep.subr.bf16.mxu0 %v2189
    %2255 = vmatpush2.bf16.msra.mxu0 %v2188
    %2256 = vmatprep.subr.bf16.mxu0 %v2187
    %2257 = vmatpush2.bf16.msra.mxu0 %v2186
    %2258 = vmatprep.subr.bf16.mxu0 %v2185
    %2259 = vmatpush2.bf16.msra.mxu0 %v2184
    %2260 = vmatprep.subr.bf16.mxu0 %v2183
    %2261 = vmatpush2.bf16.msra.mxu0 %v2182
    %2262 = vmatprep.mubr.bf16.mxu0 %v2024
    %2263 = vmatmul.mubr.bf16.gmra.mxu0 %v2023
    %v2264 = vpop.f32.mrf.mxu0
    %v2265 = vadd.f32 %v2063, %v2264
    %v2266 = vpop.f32.mrf.mxu0
    %v2267 = vadd.f32 %v2067, %v2266
    %v2268 = vpop.f32.mrf.mxu0
    %v2269 = vpop.f32.mrf.mxu0
    %2270 = vdwg.mxu0
    %v2271 = vmax.f32 %v2265, 0.0
    %v2272 = vmax.f32 %v2267, 0.0
    %v2273 = vpack.c.bf16 %v2271, %v2271
    %v2274 = vpack.c.bf16 %v2272, %v2272
    %v2275 = vld [vmem:[#allocation9 + $0x8] sm:$0xff]
    %v2276 = vld [vmem:[#allocation9 + $0x1c] sm:$0xff]
    %v2277 = vld [vmem:[#allocation9 + $0x30] sm:$0xff]
    %v2278 = vld [vmem:[#allocation9 + $0x44] sm:$0xff]
    %v2279 = vld [vmem:[#allocation9 + $0x58] sm:$0xff]
    %v2280 = vld [vmem:[#allocation9 + $0x6c] sm:$0xff]
    %v2281 = vld [vmem:[#allocation9 + $0x80] sm:$0xff]
    %v2282 = vld [vmem:[#allocation9 + $0x94] sm:$0xff]
    %v2283 = vld [vmem:[#allocation9 + $0xa8] sm:$0xff]
    %v2284 = vld [vmem:[#allocation9 + $0xbc] sm:$0xff]
    %v2285 = vld [vmem:[#allocation9 + $0xd0] sm:$0xff]
    %v2286 = vld [vmem:[#allocation9 + $0xe4] sm:$0xff]
    %v2287 = vld [vmem:[#allocation9 + $0xf8] sm:$0xff]
    %v2288 = vld [vmem:[#allocation9 + $0x10c] sm:$0xff]
    %v2289 = vld [vmem:[#allocation9 + $0x120] sm:$0xff]
    %v2290 = vld [vmem:[#allocation9 + $0x134] sm:$0xff]
    %v2291 = vld [vmem:[#allocation9 + $0x148] sm:$0xff]
    %v2292 = vld [vmem:[#allocation9 + $0x15c] sm:$0xff]
    %v2293 = vld [vmem:[#allocation9 + $0x170] sm:$0xff]
    %v2294 = vld [vmem:[#allocation9 + $0x184] sm:$0xff]
    %v2295 = vld [vmem:[#allocation9 + $0x198] sm:$0xff]
    %v2296 = vld [vmem:[#allocation9 + $0x1ac] sm:$0xff]
    %v2297 = vld [vmem:[#allocation9 + $0x1c0] sm:$0xff]
    %v2298 = vld [vmem:[#allocation9 + $0x1d4] sm:$0xff]
    %v2299 = vld [vmem:[#allocation9 + $0x1e8] sm:$0xff]
    %v2300 = vld [vmem:[#allocation9 + $0x1fc] sm:$0xff]
    %v2301 = vld [vmem:[#allocation9 + $0x210] sm:$0xff]
    %v2302 = vld [vmem:[#allocation9 + $0x224] sm:$0xff]
    %v2303 = vld [vmem:[#allocation9 + $0x238] sm:$0xff]
    %v2304 = vld [vmem:[#allocation9 + $0x24c] sm:$0xff]
    %v2305 = vld [vmem:[#allocation9 + $0x260] sm:$0xff]
    %v2306 = vld [vmem:[#allocation9 + $0x274] sm:$0xff]
    %s2307 = scalar_lea.vmem [#allocation12], 4
    %v2308 = vld [vmem:[%s2307] ss:$8 sm:$0x3]
    %v2310 = vlaneseq
    %v2311 = vshrl.u32 %v2310, 7
    %v2312 = vsub.s32 0, %v2311
    %v2313 = vrot.slane %v2308, %v2312
    %v2314 = vlaneseq
    %v2315 = vshrl.u32 %v2314, 7
    %v2316 = vsub.s32 1, %v2315
    %v2317 = vrot.slane %v2308, %v2316
    %v2352 = vunpack.c.l.b16 %v2275
    %v2353 = vunpack.c.h.b16 %v2275
    %v2354 = vunpack.c.l.b16 %v2276
    %v2355 = vunpack.c.h.b16 %v2276
    %v2356 = vunpack.c.l.b16 %v2277
    %v2357 = vunpack.c.h.b16 %v2277
    %v2358 = vunpack.c.l.b16 %v2278
    %v2359 = vunpack.c.h.b16 %v2278
    %v2360 = vunpack.c.l.b16 %v2279
    %v2361 = vunpack.c.h.b16 %v2279
    %v2362 = vunpack.c.l.b16 %v2280
    %v2363 = vunpack.c.h.b16 %v2280
    %v2364 = vunpack.c.l.b16 %v2281
    %v2365 = vunpack.c.h.b16 %v2281
    %v2366 = vunpack.c.l.b16 %v2282
    %v2367 = vunpack.c.h.b16 %v2282
    %v2368 = vunpack.c.l.b16 %v2283
    %v2369 = vunpack.c.h.b16 %v2283
    %v2370 = vunpack.c.l.b16 %v2284
    %v2371 = vunpack.c.h.b16 %v2284
    %v2372 = vunpack.c.l.b16 %v2285
    %v2373 = vunpack.c.h.b16 %v2285
    %v2374 = vunpack.c.l.b16 %v2286
    %v2375 = vunpack.c.h.b16 %v2286
    %v2376 = vunpack.c.l.b16 %v2287
    %v2377 = vunpack.c.h.b16 %v2287
    %v2378 = vunpack.c.l.b16 %v2288
    %v2379 = vunpack.c.h.b16 %v2288
    %v2380 = vunpack.c.l.b16 %v2289
    %v2381 = vunpack.c.h.b16 %v2289
    %v2382 = vunpack.c.l.b16 %v2290
    %v2383 = vunpack.c.h.b16 %v2290
    %v2384 = vunpack.c.l.b16 %v2291
    %v2385 = vunpack.c.h.b16 %v2291
    %v2386 = vunpack.c.l.b16 %v2292
    %v2387 = vunpack.c.h.b16 %v2292
    %v2388 = vunpack.c.l.b16 %v2293
    %v2389 = vunpack.c.h.b16 %v2293
    %v2390 = vunpack.c.l.b16 %v2294
    %v2391 = vunpack.c.h.b16 %v2294
    %v2392 = vunpack.c.l.b16 %v2295
    %v2393 = vunpack.c.h.b16 %v2295
    %v2394 = vunpack.c.l.b16 %v2296
    %v2395 = vunpack.c.h.b16 %v2296
    %v2396 = vunpack.c.l.b16 %v2297
    %v2397 = vunpack.c.h.b16 %v2297
    %v2398 = vunpack.c.l.b16 %v2298
    %v2399 = vunpack.c.h.b16 %v2298
    %v2400 = vunpack.c.l.b16 %v2299
    %v2401 = vunpack.c.h.b16 %v2299
    %v2402 = vunpack.c.l.b16 %v2300
    %v2403 = vunpack.c.h.b16 %v2300
    %v2404 = vunpack.c.l.b16 %v2301
    %v2405 = vunpack.c.h.b16 %v2301
    %v2406 = vunpack.c.l.b16 %v2302
    %v2407 = vunpack.c.h.b16 %v2302
    %v2408 = vunpack.c.l.b16 %v2303
    %v2409 = vunpack.c.h.b16 %v2303
    %v2410 = vunpack.c.l.b16 %v2304
    %v2411 = vunpack.c.h.b16 %v2304
    %v2412 = vunpack.c.l.b16 %v2305
    %v2413 = vunpack.c.h.b16 %v2305
    %v2414 = vunpack.c.l.b16 %v2306
    %v2415 = vunpack.c.h.b16 %v2306
    %v2416 = vpack.c.b16 %v2354, %v2352
    %v2417 = vpack.c.b16 %v2355, %v2353
    %v2418 = vpack.c.b16 %v2358, %v2356
    %v2419 = vpack.c.b16 %v2359, %v2357
    %v2420 = vpack.c.b16 %v2362, %v2360
    %v2421 = vpack.c.b16 %v2363, %v2361
    %v2422 = vpack.c.b16 %v2366, %v2364
    %v2423 = vpack.c.b16 %v2367, %v2365
    %v2424 = vpack.c.b16 %v2370, %v2368
    %v2425 = vpack.c.b16 %v2371, %v2369
    %v2426 = vpack.c.b16 %v2374, %v2372
    %v2427 = vpack.c.b16 %v2375, %v2373
    %v2428 = vpack.c.b16 %v2378, %v2376
    %v2429 = vpack.c.b16 %v2379, %v2377
    %v2430 = vpack.c.b16 %v2382, %v2380
    %v2431 = vpack.c.b16 %v2383, %v2381
    %v2432 = vpack.c.b16 %v2386, %v2384
    %v2433 = vpack.c.b16 %v2387, %v2385
    %v2434 = vpack.c.b16 %v2390, %v2388
    %v2435 = vpack.c.b16 %v2391, %v2389
    %v2436 = vpack.c.b16 %v2394, %v2392
    %v2437 = vpack.c.b16 %v2395, %v2393
    %v2438 = vpack.c.b16 %v2398, %v2396
    %v2439 = vpack.c.b16 %v2399, %v2397
    %v2440 = vpack.c.b16 %v2402, %v2400
    %v2441 = vpack.c.b16 %v2403, %v2401
    %v2442 = vpack.c.b16 %v2406, %v2404
    %v2443 = vpack.c.b16 %v2407, %v2405
    %v2444 = vpack.c.b16 %v2410, %v2408
    %v2445 = vpack.c.b16 %v2411, %v2409
    %v2446 = vpack.c.b16 %v2414, %v2412
    %v2447 = vpack.c.b16 %v2415, %v2413
    %2480 = vmatprep.subr.bf16.mxu0 %v2431
    %2481 = vmatpush1.bf16.msra.mxu0 %v2430
    %2482 = vmatprep.subr.bf16.mxu0 %v2429
    %2483 = vmatpush1.bf16.msra.mxu0 %v2428
    %2484 = vmatprep.subr.bf16.mxu0 %v2427
    %2485 = vmatpush1.bf16.msra.mxu0 %v2426
    %2486 = vmatprep.subr.bf16.mxu0 %v2425
    %2487 = vmatpush1.bf16.msra.mxu0 %v2424
    %2488 = vmatprep.subr.bf16.mxu0 %v2423
    %2489 = vmatpush1.bf16.msra.mxu0 %v2422
    %2490 = vmatprep.subr.bf16.mxu0 %v2421
    %2491 = vmatpush1.bf16.msra.mxu0 %v2420
    %2492 = vmatprep.subr.bf16.mxu0 %v2419
    %2493 = vmatpush1.bf16.msra.mxu0 %v2418
    %2494 = vmatprep.subr.bf16.mxu0 %v2417
    %2495 = vmatpush1.bf16.msra.mxu0 %v2416
    %2496 = vmatprep.subr.bf16.mxu0 %v2447
    %2497 = vmatpush2.bf16.msra.mxu0 %v2446
    %2498 = vmatprep.subr.bf16.mxu0 %v2445
    %2499 = vmatpush2.bf16.msra.mxu0 %v2444
    %2500 = vmatprep.subr.bf16.mxu0 %v2443
    %2501 = vmatpush2.bf16.msra.mxu0 %v2442
    %2502 = vmatprep.subr.bf16.mxu0 %v2441
    %2503 = vmatpush2.bf16.msra.mxu0 %v2440
    %2504 = vmatprep.subr.bf16.mxu0 %v2439
    %2505 = vmatpush2.bf16.msra.mxu0 %v2438
    %2506 = vmatprep.subr.bf16.mxu0 %v2437
    %2507 = vmatpush2.bf16.msra.mxu0 %v2436
    %2508 = vmatprep.subr.bf16.mxu0 %v2435
    %2509 = vmatpush2.bf16.msra.mxu0 %v2434
    %2510 = vmatprep.subr.bf16.mxu0 %v2433
    %2511 = vmatpush2.bf16.msra.mxu0 %v2432
    %2512 = vmatprep.mubr.bf16.mxu0 %v2274
    %2513 = vmatmul.mubr.bf16.gmra.mxu0 %v2273
    %v2514 = vpop.f32.mrf.mxu0
    %v2515 = vadd.f32 %v2313, %v2514
    %v2516 = vpop.f32.mrf.mxu0
    %v2517 = vadd.f32 %v2317, %v2516
    %v2518 = vpop.f32.mrf.mxu0
    %v2519 = vpop.f32.mrf.mxu0
    %2520 = vdwg.mxu0
    %v2521 = vmax.f32 %v2515, 0.0
    %v2522 = vmax.f32 %v2517, 0.0
    %v2523 = vpack.c.bf16 %v2521, %v2521
    %v2524 = vpack.c.bf16 %v2522, %v2522
    %v2525 = vld [vmem:[#allocation9 + $0x10] sm:$0xf]
    %v2526 = vld [vmem:[#allocation9 + $0x24] sm:$0xf]
    %v2527 = vld [vmem:[#allocation9 + $0x38] sm:$0xf]
    %v2528 = vld [vmem:[#allocation9 + $0x4c] sm:$0xf]
    %v2529 = vld [vmem:[#allocation9 + $0x60] sm:$0xf]
    %v2530 = vld [vmem:[#allocation9 + $0x74] sm:$0xf]
    %v2531 = vld [vmem:[#allocation9 + $0x88] sm:$0xf]
    %v2532 = vld [vmem:[#allocation9 + $0x9c] sm:$0xf]
    %v2533 = vld [vmem:[#allocation9 + $0xb0] sm:$0xf]
    %v2534 = vld [vmem:[#allocation9 + $0xc4] sm:$0xf]
    %v2535 = vld [vmem:[#allocation9 + $0xd8] sm:$0xf]
    %v2536 = vld [vmem:[#allocation9 + $0xec] sm:$0xf]
    %v2537 = vld [vmem:[#allocation9 + $0x100] sm:$0xf]
    %v2538 = vld [vmem:[#allocation9 + $0x114] sm:$0xf]
    %v2539 = vld [vmem:[#allocation9 + $0x128] sm:$0xf]
    %v2540 = vld [vmem:[#allocation9 + $0x13c] sm:$0xf]
    %v2541 = vld [vmem:[#allocation9 + $0x150] sm:$0xf]
    %v2542 = vld [vmem:[#allocation9 + $0x164] sm:$0xf]
    %v2543 = vld [vmem:[#allocation9 + $0x178] sm:$0xf]
    %v2544 = vld [vmem:[#allocation9 + $0x18c] sm:$0xf]
    %v2545 = vld [vmem:[#allocation9 + $0x1a0] sm:$0xf]
    %v2546 = vld [vmem:[#allocation9 + $0x1b4] sm:$0xf]
    %v2547 = vld [vmem:[#allocation9 + $0x1c8] sm:$0xf]
    %v2548 = vld [vmem:[#allocation9 + $0x1dc] sm:$0xf]
    %v2549 = vld [vmem:[#allocation9 + $0x1f0] sm:$0xf]
    %v2550 = vld [vmem:[#allocation9 + $0x204] sm:$0xf]
    %v2551 = vld [vmem:[#allocation9 + $0x218] sm:$0xf]
    %v2552 = vld [vmem:[#allocation9 + $0x22c] sm:$0xf]
    %v2553 = vld [vmem:[#allocation9 + $0x240] sm:$0xf]
    %v2554 = vld [vmem:[#allocation9 + $0x254] sm:$0xf]
    %v2555 = vld [vmem:[#allocation9 + $0x268] sm:$0xf]
    %v2556 = vld [vmem:[#allocation9 + $0x27c] sm:$0xf]
    %v2557 = vld [vmem:[#allocation12 + $0x5] ss:$0 sm:$0xff]
    %v2590 = vunpack.c.l.b16 %v2525
    %v2591 = vunpack.c.l.b16 %v2526
    %v2592 = vunpack.c.l.b16 %v2527
    %v2593 = vunpack.c.l.b16 %v2528
    %v2594 = vunpack.c.l.b16 %v2529
    %v2595 = vunpack.c.l.b16 %v2530
    %v2596 = vunpack.c.l.b16 %v2531
    %v2597 = vunpack.c.l.b16 %v2532
    %v2598 = vunpack.c.l.b16 %v2533
    %v2599 = vunpack.c.l.b16 %v2534
    %v2600 = vunpack.c.l.b16 %v2535
    %v2601 = vunpack.c.l.b16 %v2536
    %v2602 = vunpack.c.l.b16 %v2537
    %v2603 = vunpack.c.l.b16 %v2538
    %v2604 = vunpack.c.l.b16 %v2539
    %v2605 = vunpack.c.l.b16 %v2540
    %v2606 = vunpack.c.l.b16 %v2541
    %v2607 = vunpack.c.l.b16 %v2542
    %v2608 = vunpack.c.l.b16 %v2543
    %v2609 = vunpack.c.l.b16 %v2544
    %v2610 = vunpack.c.l.b16 %v2545
    %v2611 = vunpack.c.l.b16 %v2546
    %v2612 = vunpack.c.l.b16 %v2547
    %v2613 = vunpack.c.l.b16 %v2548
    %v2614 = vunpack.c.l.b16 %v2549
    %v2615 = vunpack.c.l.b16 %v2550
    %v2616 = vunpack.c.l.b16 %v2551
    %v2617 = vunpack.c.l.b16 %v2552
    %v2618 = vunpack.c.l.b16 %v2553
    %v2619 = vunpack.c.l.b16 %v2554
    %v2620 = vunpack.c.l.b16 %v2555
    %v2621 = vunpack.c.l.b16 %v2556
    %v2622 = vpack.c.b16 %v2591, %v2590
    %v2623 = vpack.c.b16 %v2593, %v2592
    %v2624 = vpack.c.b16 %v2595, %v2594
    %v2625 = vpack.c.b16 %v2597, %v2596
    %v2626 = vpack.c.b16 %v2599, %v2598
    %v2627 = vpack.c.b16 %v2601, %v2600
    %v2628 = vpack.c.b16 %v2603, %v2602
    %v2629 = vpack.c.b16 %v2605, %v2604
    %v2630 = vpack.c.b16 %v2607, %v2606
    %v2631 = vpack.c.b16 %v2609, %v2608
    %v2632 = vpack.c.b16 %v2611, %v2610
    %v2633 = vpack.c.b16 %v2613, %v2612
    %v2634 = vpack.c.b16 %v2615, %v2614
    %v2635 = vpack.c.b16 %v2617, %v2616
    %v2636 = vpack.c.b16 %v2619, %v2618
    %v2637 = vpack.c.b16 %v2621, %v2620
    %2654 = vmatprep.subr.bf16.mxu0 0
    %2655 = vmatpush1.bf16.msra.mxu0 %v2629
    %2656 = vmatprep.subr.bf16.mxu0 0
    %2657 = vmatpush1.bf16.msra.mxu0 %v2628
    %2658 = vmatprep.subr.bf16.mxu0 0
    %2659 = vmatpush1.bf16.msra.mxu0 %v2627
    %2660 = vmatprep.subr.bf16.mxu0 0
    %2661 = vmatpush1.bf16.msra.mxu0 %v2626
    %2662 = vmatprep.subr.bf16.mxu0 0
    %2663 = vmatpush1.bf16.msra.mxu0 %v2625
    %2664 = vmatprep.subr.bf16.mxu0 0
    %2665 = vmatpush1.bf16.msra.mxu0 %v2624
    %2666 = vmatprep.subr.bf16.mxu0 0
    %2667 = vmatpush1.bf16.msra.mxu0 %v2623
    %2668 = vmatprep.subr.bf16.mxu0 0
    %2669 = vmatpush1.bf16.msra.mxu0 %v2622
    %2670 = vmatprep.subr.bf16.mxu0 0
    %2671 = vmatpush2.bf16.msra.mxu0 %v2637
    %2672 = vmatprep.subr.bf16.mxu0 0
    %2673 = vmatpush2.bf16.msra.mxu0 %v2636
    %2674 = vmatprep.subr.bf16.mxu0 0
    %2675 = vmatpush2.bf16.msra.mxu0 %v2635
    %2676 = vmatprep.subr.bf16.mxu0 0
    %2677 = vmatpush2.bf16.msra.mxu0 %v2634
    %2678 = vmatprep.subr.bf16.mxu0 0
    %2679 = vmatpush2.bf16.msra.mxu0 %v2633
    %2680 = vmatprep.subr.bf16.mxu0 0
    %2681 = vmatpush2.bf16.msra.mxu0 %v2632
    %2682 = vmatprep.subr.bf16.mxu0 0
    %2683 = vmatpush2.bf16.msra.mxu0 %v2631
    %2684 = vmatprep.subr.bf16.mxu0 0
    %2685 = vmatpush2.bf16.msra.mxu0 %v2630
    %2686 = vmatprep.mubr.bf16.mxu0 %v2524
    %2687 = vmatmul.mubr.bf16.gmra.mxu0 %v2523
    %v2688 = vpop.f32.mrf.mxu0
    %v2689 = vadd.f32 %v2557, %v2688
    %v2690 = vpop.f32.mrf.mxu0
    %v2691 = vpop.f32.mrf.mxu0
    %v2692 = vpop.f32.mrf.mxu0
    %2693 = vdwg.mxu0
    %v2694 = vmax.f32 %v2689, 0.0
    %v2695 = vpack.c.bf16 %v2694, %v2694
    %v2696 = vld [vmem:[#allocation11] sm:$0xf]
    %v2697 = vld [vmem:[#allocation11 + $0x10] sm:$0xf]
    %v2698 = vld [vmem:[#allocation11 + $0x20] sm:$0xf]
    %v2699 = vld [vmem:[#allocation11 + $0x30] sm:$0xf]
    %v2700 = vld [vmem:[#allocation11 + $0x40] sm:$0xf]
    %v2701 = vld [vmem:[#allocation11 + $0x50] sm:$0xf]
    %v2702 = vld [vmem:[#allocation11 + $0x60] sm:$0xf]
    %v2703 = vld [vmem:[#allocation11 + $0x70] sm:$0xf]
    %v2704 = vld [vmem:[#allocation11 + $0x80] sm:$0xf]
    %v2705 = vld [vmem:[#allocation11 + $0x90] sm:$0xf]
    %v2706 = vld [vmem:[#allocation11 + $0xa0] sm:$0xf]
    %v2707 = vld [vmem:[#allocation11 + $0xb0] sm:$0xf]
    %v2708 = vld [vmem:[#allocation11 + $0xc0] sm:$0xf]
    %v2709 = vld [vmem:[#allocation11 + $0xd0] sm:$0xf]
    %v2710 = vld [vmem:[#allocation11 + $0xe0] sm:$0xf]
    %v2711 = vld [vmem:[#allocation11 + $0xf0] sm:$0xf]
    %v2712 = vld [vmem:[#allocation12 + $0x6] ss:$0 sm:$0xff]
    %v2729 = vunpack.c.l.b16 %v2696
    %v2730 = vunpack.c.l.b16 %v2697
    %v2731 = vunpack.c.l.b16 %v2698
    %v2732 = vunpack.c.l.b16 %v2699
    %v2733 = vunpack.c.l.b16 %v2700
    %v2734 = vunpack.c.l.b16 %v2701
    %v2735 = vunpack.c.l.b16 %v2702
    %v2736 = vunpack.c.l.b16 %v2703
    %v2737 = vunpack.c.l.b16 %v2704
    %v2738 = vunpack.c.l.b16 %v2705
    %v2739 = vunpack.c.l.b16 %v2706
    %v2740 = vunpack.c.l.b16 %v2707
    %v2741 = vunpack.c.l.b16 %v2708
    %v2742 = vunpack.c.l.b16 %v2709
    %v2743 = vunpack.c.l.b16 %v2710
    %v2744 = vunpack.c.l.b16 %v2711
    %v2745 = vpack.c.b16 %v2730, %v2729
    %v2746 = vpack.c.b16 %v2732, %v2731
    %v2747 = vpack.c.b16 %v2734, %v2733
    %v2748 = vpack.c.b16 %v2736, %v2735
    %v2749 = vpack.c.b16 %v2738, %v2737
    %v2750 = vpack.c.b16 %v2740, %v2739
    %v2751 = vpack.c.b16 %v2742, %v2741
    %v2752 = vpack.c.b16 %v2744, %v2743
    %2761 = vmatprep.subr.bf16.mxu0 0
    %2762 = vmatpush1.bf16.msra.mxu0 %v2752
    %2763 = vmatprep.subr.bf16.mxu0 0
    %2764 = vmatpush1.bf16.msra.mxu0 %v2751
    %2765 = vmatprep.subr.bf16.mxu0 0
    %2766 = vmatpush1.bf16.msra.mxu0 %v2750
    %2767 = vmatprep.subr.bf16.mxu0 0
    %2768 = vmatpush1.bf16.msra.mxu0 %v2749
    %2769 = vmatprep.subr.bf16.mxu0 0
    %2770 = vmatpush1.bf16.msra.mxu0 %v2748
    %2771 = vmatprep.subr.bf16.mxu0 0
    %2772 = vmatpush1.bf16.msra.mxu0 %v2747
    %2773 = vmatprep.subr.bf16.mxu0 0
    %2774 = vmatpush1.bf16.msra.mxu0 %v2746
    %2775 = vmatprep.subr.bf16.mxu0 0
    %2776 = vmatpush1.bf16.msra.mxu0 %v2745
    %2777 = vmatprep.subr.bf16.mxu0 0
    %2778 = vmatpush2.bf16.msra.mxu0 0
    %2779 = vmatprep.subr.bf16.mxu0 0
    %2780 = vmatpush2.bf16.msra.mxu0 0
    %2781 = vmatprep.subr.bf16.mxu0 0
    %2782 = vmatpush2.bf16.msra.mxu0 0
    %2783 = vmatprep.subr.bf16.mxu0 0
    %2784 = vmatpush2.bf16.msra.mxu0 0
    %2785 = vmatprep.subr.bf16.mxu0 0
    %2786 = vmatpush2.bf16.msra.mxu0 0
    %2787 = vmatprep.subr.bf16.mxu0 0
    %2788 = vmatpush2.bf16.msra.mxu0 0
    %2789 = vmatprep.subr.bf16.mxu0 0
    %2790 = vmatpush2.bf16.msra.mxu0 0
    %2791 = vmatprep.subr.bf16.mxu0 0
    %2792 = vmatpush2.bf16.msra.mxu0 0
    %2793 = vmatprep.mubr.bf16.mxu0 0
    %2794 = vmatmul.mubr.bf16.gmra.mxu0 %v2695
    %v2795 = vpop.f32.mrf.mxu0
    %v2796 = vadd.f32 %v2712, %v2795
    %v2797 = vpop.f32.mrf.mxu0
    %v2798 = vpop.f32.mrf.mxu0
    %v2799 = vpop.f32.mrf.mxu0
    %2800 = vdwg.mxu0
    %v2801 = vmax.f32 %v2796, 0.0
    %v2802 = vmin.f32 %v2801, 6.0
    %v2803 = vpack.c.bf16 %v2802, %v2802
    %v2804 = vld [vmem:[#allocation11 + $0x4] sm:$0xf]
    %v2805 = vld [vmem:[#allocation11 + $0x14] sm:$0xf]
    %v2806 = vld [vmem:[#allocation11 + $0x24] sm:$0xf]
    %v2807 = vld [vmem:[#allocation11 + $0x34] sm:$0xf]
    %v2808 = vld [vmem:[#allocation11 + $0x44] sm:$0xf]
    %v2809 = vld [vmem:[#allocation11 + $0x54] sm:$0xf]
    %v2810 = vld [vmem:[#allocation11 + $0x64] sm:$0xf]
    %v2811 = vld [vmem:[#allocation11 + $0x74] sm:$0xf]
    %v2812 = vld [vmem:[#allocation11 + $0x84] sm:$0xf]
    %v2813 = vld [vmem:[#allocation11 + $0x94] sm:$0xf]
    %v2814 = vld [vmem:[#allocation11 + $0xa4] sm:$0xf]
    %v2815 = vld [vmem:[#allocation11 + $0xb4] sm:$0xf]
    %v2816 = vld [vmem:[#allocation11 + $0xc4] sm:$0xf]
    %v2817 = vld [vmem:[#allocation11 + $0xd4] sm:$0xf]
    %v2818 = vld [vmem:[#allocation11 + $0xe4] sm:$0xf]
    %v2819 = vld [vmem:[#allocation11 + $0xf4] sm:$0xf]
    %v2820 = vld [vmem:[#allocation12 + $0x7] ss:$0 sm:$0xff]
    %v2837 = vunpack.c.l.b16 %v2804
    %v2838 = vunpack.c.l.b16 %v2805
    %v2839 = vunpack.c.l.b16 %v2806
    %v2840 = vunpack.c.l.b16 %v2807
    %v2841 = vunpack.c.l.b16 %v2808
    %v2842 = vunpack.c.l.b16 %v2809
    %v2843 = vunpack.c.l.b16 %v2810
    %v2844 = vunpack.c.l.b16 %v2811
    %v2845 = vunpack.c.l.b16 %v2812
    %v2846 = vunpack.c.l.b16 %v2813
    %v2847 = vunpack.c.l.b16 %v2814
    %v2848 = vunpack.c.l.b16 %v2815
    %v2849 = vunpack.c.l.b16 %v2816
    %v2850 = vunpack.c.l.b16 %v2817
    %v2851 = vunpack.c.l.b16 %v2818
    %v2852 = vunpack.c.l.b16 %v2819
    %v2853 = vpack.c.b16 %v2838, %v2837
    %v2854 = vpack.c.b16 %v2840, %v2839
    %v2855 = vpack.c.b16 %v2842, %v2841
    %v2856 = vpack.c.b16 %v2844, %v2843
    %v2857 = vpack.c.b16 %v2846, %v2845
    %v2858 = vpack.c.b16 %v2848, %v2847
    %v2859 = vpack.c.b16 %v2850, %v2849
    %v2860 = vpack.c.b16 %v2852, %v2851
    %2869 = vmatprep.subr.bf16.mxu0 0
    %2870 = vmatpush1.bf16.msra.mxu0 %v2860
    %2871 = vmatprep.subr.bf16.mxu0 0
    %2872 = vmatpush1.bf16.msra.mxu0 %v2859
    %2873 = vmatprep.subr.bf16.mxu0 0
    %2874 = vmatpush1.bf16.msra.mxu0 %v2858
    %2875 = vmatprep.subr.bf16.mxu0 0
    %2876 = vmatpush1.bf16.msra.mxu0 %v2857
    %2877 = vmatprep.subr.bf16.mxu0 0
    %2878 = vmatpush1.bf16.msra.mxu0 %v2856
    %2879 = vmatprep.subr.bf16.mxu0 0
    %2880 = vmatpush1.bf16.msra.mxu0 %v2855
    %2881 = vmatprep.subr.bf16.mxu0 0
    %2882 = vmatpush1.bf16.msra.mxu0 %v2854
    %2883 = vmatprep.subr.bf16.mxu0 0
    %2884 = vmatpush1.bf16.msra.mxu0 %v2853
    %2885 = vmatprep.subr.bf16.mxu0 0
    %2886 = vmatpush2.bf16.msra.mxu0 0
    %2887 = vmatprep.subr.bf16.mxu0 0
    %2888 = vmatpush2.bf16.msra.mxu0 0
    %2889 = vmatprep.subr.bf16.mxu0 0
    %2890 = vmatpush2.bf16.msra.mxu0 0
    %2891 = vmatprep.subr.bf16.mxu0 0
    %2892 = vmatpush2.bf16.msra.mxu0 0
    %2893 = vmatprep.subr.bf16.mxu0 0
    %2894 = vmatpush2.bf16.msra.mxu0 0
    %2895 = vmatprep.subr.bf16.mxu0 0
    %2896 = vmatpush2.bf16.msra.mxu0 0
    %2897 = vmatprep.subr.bf16.mxu0 0
    %2898 = vmatpush2.bf16.msra.mxu0 0
    %2899 = vmatprep.subr.bf16.mxu0 0
    %2900 = vmatpush2.bf16.msra.mxu0 0
    %2901 = vmatprep.mubr.bf16.mxu0 0
    %2902 = vmatmul.mubr.bf16.gmra.mxu0 %v2803
    %v2903 = vpop.f32.mrf.mxu0
    %v2904 = vadd.f32 %v2820, %v2903
    %v2905 = vpop.f32.mrf.mxu0
    %v2906 = vpop.f32.mrf.mxu0
    %v2907 = vpop.f32.mrf.mxu0
    %2908 = vdwg.mxu0
    %v2909 = vmax.f32 %v2904, 0.0
    %v2910 = vmin.f32 %v2909, 6.0
    %v2911 = vpack.c.bf16 %v2910, %v2910
    %v2912 = vld [vmem:[#allocation11 + $0x8] sm:$0xf]
    %v2913 = vld [vmem:[#allocation11 + $0x18] sm:$0xf]
    %v2914 = vld [vmem:[#allocation11 + $0x28] sm:$0xf]
    %v2915 = vld [vmem:[#allocation11 + $0x38] sm:$0xf]
    %v2916 = vld [vmem:[#allocation11 + $0x48] sm:$0xf]
    %v2917 = vld [vmem:[#allocation11 + $0x58] sm:$0xf]
    %v2918 = vld [vmem:[#allocation11 + $0x68] sm:$0xf]
    %v2919 = vld [vmem:[#allocation11 + $0x78] sm:$0xf]
    %v2920 = vld [vmem:[#allocation11 + $0x88] sm:$0xf]
    %v2921 = vld [vmem:[#allocation11 + $0x98] sm:$0xf]
    %v2922 = vld [vmem:[#allocation11 + $0xa8] sm:$0xf]
    %v2923 = vld [vmem:[#allocation11 + $0xb8] sm:$0xf]
    %v2924 = vld [vmem:[#allocation11 + $0xc8] sm:$0xf]
    %v2925 = vld [vmem:[#allocation11 + $0xd8] sm:$0xf]
    %v2926 = vld [vmem:[#allocation11 + $0xe8] sm:$0xf]
    %v2927 = vld [vmem:[#allocation11 + $0xf8] sm:$0xf]
    %v2928 = vld [vmem:[#allocation12 + $0x18] ss:$0 sm:$0xff]
    %v2945 = vunpack.c.l.b16 %v2912
    %v2946 = vunpack.c.l.b16 %v2913
    %v2947 = vunpack.c.l.b16 %v2914
    %v2948 = vunpack.c.l.b16 %v2915
    %v2949 = vunpack.c.l.b16 %v2916
    %v2950 = vunpack.c.l.b16 %v2917
    %v2951 = vunpack.c.l.b16 %v2918
    %v2952 = vunpack.c.l.b16 %v2919
    %v2953 = vunpack.c.l.b16 %v2920
    %v2954 = vunpack.c.l.b16 %v2921
    %v2955 = vunpack.c.l.b16 %v2922
    %v2956 = vunpack.c.l.b16 %v2923
    %v2957 = vunpack.c.l.b16 %v2924
    %v2958 = vunpack.c.l.b16 %v2925
    %v2959 = vunpack.c.l.b16 %v2926
    %v2960 = vunpack.c.l.b16 %v2927
    %v2961 = vpack.c.b16 %v2946, %v2945
    %v2962 = vpack.c.b16 %v2948, %v2947
    %v2963 = vpack.c.b16 %v2950, %v2949
    %v2964 = vpack.c.b16 %v2952, %v2951
    %v2965 = vpack.c.b16 %v2954, %v2953
    %v2966 = vpack.c.b16 %v2956, %v2955
    %v2967 = vpack.c.b16 %v2958, %v2957
    %v2968 = vpack.c.b16 %v2960, %v2959
    %2977 = vmatprep.subr.bf16.mxu0 0
    %2978 = vmatpush1.bf16.msra.mxu0 %v2968
    %2979 = vmatprep.subr.bf16.mxu0 0
    %2980 = vmatpush1.bf16.msra.mxu0 %v2967
    %2981 = vmatprep.subr.bf16.mxu0 0
    %2982 = vmatpush1.bf16.msra.mxu0 %v2966
    %2983 = vmatprep.subr.bf16.mxu0 0
    %2984 = vmatpush1.bf16.msra.mxu0 %v2965
    %2985 = vmatprep.subr.bf16.mxu0 0
    %2986 = vmatpush1.bf16.msra.mxu0 %v2964
    %2987 = vmatprep.subr.bf16.mxu0 0
    %2988 = vmatpush1.bf16.msra.mxu0 %v2963
    %2989 = vmatprep.subr.bf16.mxu0 0
    %2990 = vmatpush1.bf16.msra.mxu0 %v2962
    %2991 = vmatprep.subr.bf16.mxu0 0
    %2992 = vmatpush1.bf16.msra.mxu0 %v2961
    %2993 = vmatprep.subr.bf16.mxu0 0
    %2994 = vmatpush2.bf16.msra.mxu0 0
    %2995 = vmatprep.subr.bf16.mxu0 0
    %2996 = vmatpush2.bf16.msra.mxu0 0
    %2997 = vmatprep.subr.bf16.mxu0 0
    %2998 = vmatpush2.bf16.msra.mxu0 0
    %2999 = vmatprep.subr.bf16.mxu0 0
    %3000 = vmatpush2.bf16.msra.mxu0 0
    %3001 = vmatprep.subr.bf16.mxu0 0
    %3002 = vmatpush2.bf16.msra.mxu0 0
    %3003 = vmatprep.subr.bf16.mxu0 0
    %3004 = vmatpush2.bf16.msra.mxu0 0
    %3005 = vmatprep.subr.bf16.mxu0 0
    %3006 = vmatpush2.bf16.msra.mxu0 0
    %3007 = vmatprep.subr.bf16.mxu0 0
    %3008 = vmatpush2.bf16.msra.mxu0 0
    %3009 = vmatprep.mubr.bf16.mxu0 0
    %3010 = vmatmul.mubr.bf16.gmra.mxu0 %v2911
    %v3011 = vpop.f32.mrf.mxu0
    %v3012 = vadd.f32 %v2928, %v3011
    %v3013 = vpop.f32.mrf.mxu0
    %v3014 = vpop.f32.mrf.mxu0
    %v3015 = vpop.f32.mrf.mxu0
    %3016 = vdwg.mxu0
    %v3017 = vmax.f32 %v3012, 0.0
    %v3018 = vmin.f32 %v3017, 6.0
    %v3019 = vpack.c.bf16 %v3018, %v3018
    %v3020 = vld [vmem:[#allocation11 + $0xc] sm:$0xf]
    %v3021 = vld [vmem:[#allocation11 + $0x1c] sm:$0xf]
    %v3022 = vld [vmem:[#allocation11 + $0x2c] sm:$0xf]
    %v3023 = vld [vmem:[#allocation11 + $0x3c] sm:$0xf]
    %v3024 = vld [vmem:[#allocation11 + $0x4c] sm:$0xf]
    %v3025 = vld [vmem:[#allocation11 + $0x5c] sm:$0xf]
    %v3026 = vld [vmem:[#allocation11 + $0x6c] sm:$0xf]
    %v3027 = vld [vmem:[#allocation11 + $0x7c] sm:$0xf]
    %v3028 = vld [vmem:[#allocation11 + $0x8c] sm:$0xf]
    %v3029 = vld [vmem:[#allocation11 + $0x9c] sm:$0xf]
    %v3030 = vld [vmem:[#allocation11 + $0xac] sm:$0xf]
    %v3031 = vld [vmem:[#allocation11 + $0xbc] sm:$0xf]
    %v3032 = vld [vmem:[#allocation11 + $0xcc] sm:$0xf]
    %v3033 = vld [vmem:[#allocation11 + $0xdc] sm:$0xf]
    %v3034 = vld [vmem:[#allocation11 + $0xec] sm:$0xf]
    %v3035 = vld [vmem:[#allocation11 + $0xfc] sm:$0xf]
    %v3036 = vld [vmem:[#allocation12 + $0x19] ss:$0 sm:$0xff]
    %v3053 = vunpack.c.l.b16 %v3020
    %v3054 = vunpack.c.l.b16 %v3021
    %v3055 = vunpack.c.l.b16 %v3022
    %v3056 = vunpack.c.l.b16 %v3023
    %v3057 = vunpack.c.l.b16 %v3024
    %v3058 = vunpack.c.l.b16 %v3025
    %v3059 = vunpack.c.l.b16 %v3026
    %v3060 = vunpack.c.l.b16 %v3027
    %v3061 = vunpack.c.l.b16 %v3028
    %v3062 = vunpack.c.l.b16 %v3029
    %v3063 = vunpack.c.l.b16 %v3030
    %v3064 = vunpack.c.l.b16 %v3031
    %v3065 = vunpack.c.l.b16 %v3032
    %v3066 = vunpack.c.l.b16 %v3033
    %v3067 = vunpack.c.l.b16 %v3034
    %v3068 = vunpack.c.l.b16 %v3035
    %v3069 = vpack.c.b16 %v3054, %v3053
    %v3070 = vpack.c.b16 %v3056, %v3055
    %v3071 = vpack.c.b16 %v3058, %v3057
    %v3072 = vpack.c.b16 %v3060, %v3059
    %v3073 = vpack.c.b16 %v3062, %v3061
    %v3074 = vpack.c.b16 %v3064, %v3063
    %v3075 = vpack.c.b16 %v3066, %v3065
    %v3076 = vpack.c.b16 %v3068, %v3067
    %3085 = vmatprep.subr.bf16.mxu0 0
    %3086 = vmatpush1.bf16.msra.mxu0 %v3076
    %3087 = vmatprep.subr.bf16.mxu0 0
    %3088 = vmatpush1.bf16.msra.mxu0 %v3075
    %3089 = vmatprep.subr.bf16.mxu0 0
    %3090 = vmatpush1.bf16.msra.mxu0 %v3074
    %3091 = vmatprep.subr.bf16.mxu0 0
    %3092 = vmatpush1.bf16.msra.mxu0 %v3073
    %3093 = vmatprep.subr.bf16.mxu0 0
    %3094 = vmatpush1.bf16.msra.mxu0 %v3072
    %3095 = vmatprep.subr.bf16.mxu0 0
    %3096 = vmatpush1.bf16.msra.mxu0 %v3071
    %3097 = vmatprep.subr.bf16.mxu0 0
    %3098 = vmatpush1.bf16.msra.mxu0 %v3070
    %3099 = vmatprep.subr.bf16.mxu0 0
    %3100 = vmatpush1.bf16.msra.mxu0 %v3069
    %3101 = vmatprep.subr.bf16.mxu0 0
    %3102 = vmatpush2.bf16.msra.mxu0 0
    %3103 = vmatprep.subr.bf16.mxu0 0
    %3104 = vmatpush2.bf16.msra.mxu0 0
    %3105 = vmatprep.subr.bf16.mxu0 0
    %3106 = vmatpush2.bf16.msra.mxu0 0
    %3107 = vmatprep.subr.bf16.mxu0 0
    %3108 = vmatpush2.bf16.msra.mxu0 0
    %3109 = vmatprep.subr.bf16.mxu0 0
    %3110 = vmatpush2.bf16.msra.mxu0 0
    %3111 = vmatprep.subr.bf16.mxu0 0
    %3112 = vmatpush2.bf16.msra.mxu0 0
    %3113 = vmatprep.subr.bf16.mxu0 0
    %3114 = vmatpush2.bf16.msra.mxu0 0
    %3115 = vmatprep.subr.bf16.mxu0 0
    %3116 = vmatpush2.bf16.msra.mxu0 0
    %3117 = vmatprep.mubr.bf16.mxu0 0
    %3118 = vmatmul.mubr.bf16.gmra.mxu0 %v3019
    %v3119 = vpop.f32.mrf.mxu0
    %v3120 = vadd.f32 %v3036, %v3119
    %v3121 = vpop.f32.mrf.mxu0
    %v3122 = vpop.f32.mrf.mxu0
    %v3123 = vpop.f32.mrf.mxu0
    %3124 = vdwg.mxu0
    %v3125 = vxor.u32 %v3120, 2147483648
    %v3126 = vmul.f32 %v3125, 1.442695
    %v3127 = vpow.pop %v3126
    %v3128 = vadd.f32 %v3127, 1.0
    %v3129 = vrcp.pop %v3128
    %v3130 = vmul.f32 1.0, %v3129
    %v3131 = vpack.c.bf16 %v3130, %v3130
    %3132 = vst [vmem:[#allocation14] sm:$0xf] %v3131
    // Predicated region
    $region50: #{tpu_custom_call.1} parent=1 // pred_check
      _
    $region51: #{tpu_custom_call.1} parent=1 // pred_check_branch
      %3134 = sbr.rel (0) target = $region53
    $region52: #{tpu_custom_call.1} parent=1 // pred_region
      %s3136 = ssub.s32 64, 64
      %3137 = vsyncadd [#allocation5], %s3136
      %s3139 = sshll.u32 [#allocation14], 4
      %s3140 = int_to_ptr.vmem [resolvable:$true] %s3139
      %3142 = dma.vmem_to_hbm [thread:$0]  %s3140, 64, %s6, [#allocation5]
    $region53: #{tpu_custom_call.1} parent=1 // pred_fallthru
      _
    // Predicated region
    $region54: #{tpu_custom_call.1} parent=1 // pred_check
      _
    $region55: #{tpu_custom_call.1} parent=1 // pred_check_branch
      %3144 = sbr.rel (0) target = $region57
    $region56: #{tpu_custom_call.1} parent=1 // pred_region
      %3145 = dma.done [#allocation5], 64
    $region57: #{tpu_custom_call.1} parent=1 // pred_fallthru
      _
    %3146 = vsyncpa [#allocation4], 1
    %3147 = vsyncpa [#allocation7], 1
    %3148 = vsyncpa [#allocation10], 1
    %3149 = vsyncpa [#allocation13], 1
    %3150 = vsyncpa [#allocation5], 1

</llo_original>
